<compile_context>
chip_gen: v6e
topology: v6e:2x2x1
jax: 0.10.0
libtpu: 0.0.40
codegen_flags: <defaults>
</compile_context>

<pallas_src>
from collections import OrderedDict

import numpy as np
import jax
import jax.numpy as jnp
from jax.experimental import pallas as pl
from jax.experimental.pallas import tpu as pltpu

CPAD = 128   # padded output-channel width (lane-dense)
K0PAD = 64   # padded stage-0 fan-in (true fan-in = 4*4*3 = 48)


# --------------------------------------------------------------------------
# Pallas kernel: entire 4-stage backbone for one image per grid step.
# --------------------------------------------------------------------------
def _make_kernel(return_interm: bool):
    def kernel(p_ref, w0_ref, w1_ref, w2_ref, w3_ref, b_ref, *rest):
        if return_interm:
            o0_ref, o1_ref, o2_ref, o3_ref, x1, x2, x3 = rest
        else:
            o3_ref, x1, x2, x3 = rest
            o0_ref = o1_ref = o2_ref = None

        def hand_off(y_bf16, x_next):
            # Producing stage scatters its 4 tap slabs (contiguous row blocks,
            # thanks to the hierarchical row order) into the next stage's
            # K-concat input at lane offsets q*128.  Static slices only.
            m = x_next.shape[0]
            for q in range(4):  # static unroll
                x_next[:, q * CPAD:(q + 1) * CPAD] = y_bf16[q * m:(q + 1) * m, :]

        # ---- stage 0: one K=64 matmul on the padded im2col patches ----
        y = jnp.dot(p_ref[0], w0_ref[...], preferred_element_type=jnp.float32)
        y = jnp.maximum(y + b_ref[0:1, :], 0.0).astype(jnp.bfloat16)
        if return_interm:
            o0_ref[0] = y
        hand_off(y, x1)

        # ---- stage 1: single K=512 matmul ----
        y = jnp.dot(x1[...], w1_ref[...], preferred_element_type=jnp.float32)
        y = jnp.maximum(y + b_ref[1:2, :], 0.0).astype(jnp.bfloat16)
        if return_interm:
            o1_ref[0] = y
        hand_off(y, x2)

        # ---- stage 2 ----
        y = jnp.dot(x2[...], w2_ref[...], preferred_element_type=jnp.float32)
        y = jnp.maximum(y + b_ref[2:3, :], 0.0).astype(jnp.bfloat16)
        if return_interm:
            o2_ref[0] = y
        hand_off(y, x3)

        # ---- stage 3 ----
        y = jnp.dot(x3[...], w3_ref[...], preferred_element_type=jnp.float32)
        o3_ref[0] = jnp.maximum(y + b_ref[3:4, :], 0.0).astype(jnp.bfloat16)

    return kernel


def fused_backbone(patches, w0p, w1p, w2p, w3p, bias, *, return_interm):
    """patches: (B, M0, K0PAD) bf16 in hierarchical row order.
    Returns bf16 stage outputs (hierarchical row order, CPAD lanes):
      return_interm=True : (B,M0,128), (B,M0/4,128), (B,M0/16,128), (B,M0/64,128)
      return_interm=False: only the last one."""
    B, M0, K0 = patches.shape
    M1, M2, M3 = M0 // 4, M0 // 16, M0 // 64

    def io(m):
        return pl.BlockSpec((1, m, CPAD), lambda b: (b, 0, 0))

    out_ms = (M0, M1, M2, M3) if return_interm else (M3,)
    out_shape = tuple(jax.ShapeDtypeStruct((B, m, CPAD), jnp.bfloat16)
                      for m in out_ms)
    out_specs = [io(m) for m in out_ms]

    scratch_shapes = [pltpu.VMEM((M1, 4 * CPAD), jnp.bfloat16),
                      pltpu.VMEM((M2, 4 * CPAD), jnp.bfloat16),
                      pltpu.VMEM((M3, 4 * CPAD), jnp.bfloat16)]

    w_bytes = (w0p.size + w1p.size + w2p.size + w3p.size) * 2 + bias.size * 4
    out_bytes = sum(B * m * CPAD * 2 for m in out_ms)
    cost = pl.CostEstimate(
        flops=2 * B * (M0 * K0 * CPAD + (M1 + M2 + M3) * 4 * CPAD * CPAD),
        transcendentals=0,
        bytes_accessed=patches.size * 2 + w_bytes + out_bytes)

    # Double-buffered input/output blocks + once-DMA'd weights + scratch,
    # with 2x headroom; capped at v7x's 64 MiB physical VMEM.
    vmem_est = (2 * (M0 * K0 * 2) + 2 * w_bytes
                + 2 * sum(m * CPAD * 2 for m in out_ms)
                + (M1 + M2 + M3) * 4 * CPAD * 2)
    vmem_limit = int(min(max(2 * vmem_est, 32 * 2**20), 64 * 2**20))

    return pl.pallas_call(
        _make_kernel(return_interm),
        out_shape=out_shape,
        grid_spec=pltpu.PrefetchScalarGridSpec(
            num_scalar_prefetch=0,
            grid=(B,),
            in_specs=[
                pl.BlockSpec((1, M0, K0), lambda b: (b, 0, 0)),      # patches
                pl.BlockSpec((K0PAD, CPAD), lambda b: (0, 0)),       # W0 (once)
                pl.BlockSpec((4 * CPAD, CPAD), lambda b: (0, 0)),    # W1 (once)
                pl.BlockSpec((4 * CPAD, CPAD), lambda b: (0, 0)),    # W2 (once)
                pl.BlockSpec((4 * CPAD, CPAD), lambda b: (0, 0)),    # W3 (once)
                pl.BlockSpec((4, CPAD), lambda b: (0, 0)),           # biases
            ],
            out_specs=out_specs,
            scratch_shapes=scratch_shapes),
        compiler_params=pltpu.CompilerParams(
            dimension_semantics=("parallel",),
            vmem_limit_bytes=vmem_limit),
        cost_estimate=cost,
    )(patches, w0p, w1p, w2p, w3p, bias)


# --------------------------------------------------------------------------
# Hierarchical row ordering (host-side, static numpy)
# --------------------------------------------------------------------------
def _hier_order(hs, ws, levels):
    """hidx[h*ws + w] -> hierarchical row index of cell (h, w) of an (hs, ws)
    grid, with `levels` further 2x2 (stride-2) groupings following this stage.
    Within-2x2-patch position is the SLOWEST axis, so each later stage sees
    its 4 conv taps as 4 contiguous row slabs."""
    if levels == 0:
        return np.arange(hs * ws, dtype=np.int32)
    assert hs % 2 == 0 and ws % 2 == 0
    parent = _hier_order(hs // 2, ws // 2, levels - 1)
    h = np.arange(hs)[:, None]
    w = np.arange(ws)[None, :]
    q = (h % 2) * 2 + (w % 2)
    p = parent[(h // 2) * (ws // 2) + (w // 2)]
    return (q * ((hs // 2) * (ws // 2)) + p).reshape(-1).astype(np.int32)


def _stage0_patches(x_nhwc, k, row_perm):
    """im2col of non-overlapping k x k patches, rows permuted to hierarchical
    order, fan-in zero-padded to K0PAD, cast to bf16 (halves input DMA)."""
    B, H, W, C = x_nhwc.shape
    ph, pw = H // k, W // k
    p = x_nhwc.reshape(B, ph, k, pw, k, C).transpose(0, 1, 3, 2, 4, 5)
    p = p.reshape(B, ph * pw, k * k * C)
    p = jnp.take(p, row_perm, axis=1)
    p = jnp.pad(p, ((0, 0), (0, 0), (0, K0PAD - k * k * C)))
    return p.astype(jnp.bfloat16)


# --------------------------------------------------------------------------
# Deterministic synthetic backbone parameters (scaled-down ResNet stand-in)
# --------------------------------------------------------------------------
def init_backbone_params(key, in_ch=3,
                         channels=(16, 32, 64, 128),
                         kernels=(4, 2, 2, 2)):
    params = []
    c_in = in_ch
    for c_out, k in zip(channels, kernels):
        key, wk, bk = jax.random.split(key, 3)
        fan_in = k * k * c_in
        w = jax.random.normal(wk, (fan_in, c_out), jnp.float32) / jnp.sqrt(fan_in)
        b = 0.01 * jax.random.normal(bk, (c_out,), jnp.float32)
        params.append((w, b, k))
        c_in = c_out
    return params


def _prepare_fused_params(params):
    """Pad weights/biases to lane-dense blocks.  Stage-0: (K0PAD, CPAD).
    Stages 1-3: K-concat layout (4*CPAD, CPAD) — tap q occupies rows
    [q*CPAD, q*CPAD + c_in).  Padded channels stay exactly zero through every
    ReLU stage -> numerically identical to the unpadded model."""
    assert len(params) == 4
    (w0, _, k0), rest = params[0], params[1:]
    assert all(k == 2 for (_, _, k) in rest)
    k0_fanin = w0.shape[0]
    c_out = [p[0].shape[1] for p in params]
    assert k0_fanin <= K0PAD and max(c_out) <= CPAD

    w0p = jnp.zeros((K0PAD, CPAD), jnp.float32).at[:k0_fanin, :c_out[0]].set(w0)

    def pack2(w, c_in_t, c_out_t):
        # rows of w are (i, j, ci)-ordered -> q = 2*i + j tap blocks along K
        w4 = w.reshape(4, c_in_t, c_out_t)
        out = jnp.zeros((4 * CPAD, CPAD), jnp.float32)
        for q in range(4):
            out = out.at[q * CPAD:q * CPAD + c_in_t, :c_out_t].set(w4[q])
        return out

    w1p = pack2(rest[0][0], c_out[0], c_out[1])
    w2p = pack2(rest[1][0], c_out[1], c_out[2])
    w3p = pack2(rest[2][0], c_out[2], c_out[3])

    bias = jnp.zeros((4, CPAD), jnp.float32)
    for s, (_, b, _) in enumerate(params):
        bias = bias.at[s, :b.shape[0]].set(b)

    return (w0p.astype(jnp.bfloat16), w1p.astype(jnp.bfloat16),
            w2p.astype(jnp.bfloat16), w3p.astype(jnp.bfloat16),
            bias, c_out, k0)


# --------------------------------------------------------------------------
# BackboneBase equivalent
# --------------------------------------------------------------------------
class BackboneBase:
    # TODO(synk): parameter freezing (requires_grad_) is a training-time
    # concern with no forward-pass equivalent; intentionally omitted.
    def __init__(self, params, return_interm_layers: bool):
        (self.w0p, self.w1p, self.w2p, self.w3p,
         self.bias, self.c_out, self.k0) = _prepare_fused_params(params)
        self.return_interm = return_interm_layers
        if return_interm_layers:
            self.return_layers = {0: '0', 1: '1', 2: '2', 3: '3'}
            self.strides = [4, 8, 16, 32]
            self.num_channels = list(self.c_out)
        else:
            self.return_layers = {3: '0'}
            self.strides = [32]
            self.num_channels = [self.c_out[-1]]

    def forward(self, tensors_nchw, mask):
        # tensors: (B, C, H, W) float, mask: (B, H, W) bool (True = padding)
        x = jnp.transpose(tensors_nchw, (0, 2, 3, 1)).astype(jnp.float32)
        B, H, W, _ = x.shape
        assert H % 32 == 0 and W % 32 == 0, "spatial dims must be multiples of 32"

        all_strides = [4, 8, 16, 32]
        grids = [(H // s, W // s) for s in all_strides]
        hidx = [_hier_order(h, w, 3 - s) for s, (h, w) in enumerate(grids)]

        patches = _stage0_patches(x, self.k0,
                                  np.argsort(hidx[0]).astype(np.int32))
        outs = fused_backbone(patches, self.w0p, self.w1p, self.w2p,
                              self.w3p, self.bias,
                              return_interm=self.return_interm)

        out = OrderedDict()
        for s, name in self.return_layers.items():
            feat_hier = outs[s] if self.return_interm else outs[0]
            h_s, w_s = grids[s]
            c_t = self.c_out[s]
            feat = feat_hier[:, :, :c_t]                   # drop padded lanes
            if 3 - s > 0:                                  # stage 3 is already row-major
                feat = jnp.take(feat, hidx[s], axis=1)     # hier -> row-major
            feat = feat.reshape(B, h_s, w_s, c_t)
            feat_nchw = jnp.transpose(feat, (0, 3, 1, 2)).astype(jnp.float32)
            stride = all_strides[s]
            # F.interpolate(mode='nearest') to (H//s, W//s) with integer factor
            # s is exactly mask[:, ::s, ::s]; bool stays bool.
            m_out = mask[:, ::stride, ::stride]
            out[name] = (feat_nchw, m_out)
        return out


# --------------------------------------------------------------------------
# Pure-JAX f32 reference (for tolerance check of the bf16 kernel path)
# --------------------------------------------------------------------------
def reference_backbone(x_nhwc, params):
    feats = []
    h = x_nhwc
    for (w, b, k) in params:
        B, H, W, C = h.shape
        ph, pw = H // k, W // k
        p = h.reshape(B, ph, k, pw, k, C).transpose(0, 1, 3, 2, 4, 5)
        p = p.reshape(B, ph, pw, k * k * C)
        h = jnp.maximum(jnp.einsum('bhwk,kc->bhwc', p, w) + b, 0.0)
        feats.append(h)
    return feats


if __name__ == "__main__":
    key = jax.random.PRNGKey(0)
    pkey, xkey = jax.random.split(key)
    params = init_backbone_params(pkey)

    B, C, H, W = 2, 3, 64, 64
    x = jax.random.normal(xkey, (B, C, H, W), jnp.float32)
    # NestedTensor-style padding mask: True where padded.
    hh = jnp.arange(H)[None, :, None]
    ww = jnp.arange(W)[None, None, :]
    valid_h = jnp.array([64, 48])[:, None, None]
    valid_w = jnp.array([64, 40])[:, None, None]
    mask = (hh >= valid_h) | (ww >= valid_w)

    ref = reference_backbone(jnp.transpose(x, (0, 2, 3, 1)), params)

    # --- return_interm_layers=True path ---
    model = BackboneBase(params, return_interm_layers=True)
    out = jax.jit(model.forward)(x, mask)
    for s, name in model.return_layers.items():
        feat, m = out[name]
        jax.block_until_ready(feat)
        jax.block_until_ready(m)
        assert m.dtype == jnp.bool_
        assert feat.shape[-2:] == m.shape[-2:]
        ref_nchw = jnp.transpose(ref[s], (0, 3, 1, 2))
        np.testing.assert_allclose(np.asarray(feat), np.asarray(ref_nchw),
                                   rtol=0.1, atol=0.1)  # loose: bf16 MXU operands

    # --- return_interm_layers=False path (only stride-32 output emitted) ---
    model1 = BackboneBase(params, return_interm_layers=False)
    out1 = jax.jit(model1.forward)(x, mask)
    feat3, m3 = out1['0']
    jax.block_until_ready(feat3)
    assert m3.dtype == jnp.bool_ and feat3.shape[-2:] == m3.shape[-2:]
    np.testing.assert_allclose(np.asarray(feat3),
                               np.asarray(jnp.transpose(ref[3], (0, 3, 1, 2))),
                               rtol=0.1, atol=0.1)

    print("KERNEL_OK")
</pallas_src>

<mosaic_0001>
module attributes {stable_mosaic.version = 11 : i64} {
  func.func @kernel(%arg0: i32, %arg1: memref<1x256x64xbf16, #tpu.memory_space<vmem>>, %arg2: memref<64x128xbf16, #tpu.memory_space<vmem>>, %arg3: memref<512x128xbf16, #tpu.memory_space<vmem>>, %arg4: memref<512x128xbf16, #tpu.memory_space<vmem>>, %arg5: memref<512x128xbf16, #tpu.memory_space<vmem>>, %arg6: memref<4x128xf32, #tpu.memory_space<vmem>>, %arg7: memref<1x256x128xbf16, #tpu.memory_space<vmem>>, %arg8: memref<1x64x128xbf16, #tpu.memory_space<vmem>>, %arg9: memref<1x16x128xbf16, #tpu.memory_space<vmem>>, %arg10: memref<1x4x128xbf16, #tpu.memory_space<vmem>>, %arg11: memref<64x512xbf16, #tpu.memory_space<vmem>>, %arg12: memref<16x512xbf16, #tpu.memory_space<vmem>>, %arg13: memref<4x512xbf16, #tpu.memory_space<vmem>>) attributes {dimension_semantics = [#tpu.dimension_semantics<parallel>], iteration_bounds = array<i64: 2>, scalar_prefetch = 0 : i64, scratch_operands = 3 : i64, tpu.core_type = #tpu.core_type<tc>, window_params = [{transform_indices = @transform_0, window_bounds = array<i64: 1, 256, 64>}, {pipeline_mode = #tpu.pipeline_mode<synchronous>, transform_indices = @transform_1, window_bounds = array<i64: 64, 128>}, {pipeline_mode = #tpu.pipeline_mode<synchronous>, transform_indices = @transform_2, window_bounds = array<i64: 512, 128>}, {pipeline_mode = #tpu.pipeline_mode<synchronous>, transform_indices = @transform_3, window_bounds = array<i64: 512, 128>}, {pipeline_mode = #tpu.pipeline_mode<synchronous>, transform_indices = @transform_4, window_bounds = array<i64: 512, 128>}, {pipeline_mode = #tpu.pipeline_mode<synchronous>, transform_indices = @transform_5, window_bounds = array<i64: 4, 128>}, {transform_indices = @transform_6, window_bounds = array<i64: 1, 256, 128>}, {transform_indices = @transform_7, window_bounds = array<i64: 1, 64, 128>}, {transform_indices = @transform_8, window_bounds = array<i64: 1, 16, 128>}, {transform_indices = @transform_9, window_bounds = array<i64: 1, 4, 128>}]} {
    %c0 = arith.constant 0 : index
    %c0_0 = arith.constant 0 : index
    %c0_1 = arith.constant 0 : index
    %0 = vector.load %arg1[%c0, %c0_0, %c0_1] : memref<1x256x64xbf16, #tpu.memory_space<vmem>>, vector<1x256x64xbf16>
    %1 = vector.shape_cast %0 : vector<1x256x64xbf16> to vector<256x64xbf16>
    %c0_2 = arith.constant 0 : index
    %c0_3 = arith.constant 0 : index
    %2 = vector.load %arg2[%c0_2, %c0_3] : memref<64x128xbf16, #tpu.memory_space<vmem>>, vector<64x128xbf16>
    %cst = arith.constant dense<0.000000e+00> : vector<256x128xf32>
    %3 = tpu.matmul %1, %2, %cst {dimension_numbers = #tpu.dot_dimension_numbers<[1], [0], [0], [1], [0, 0, 1, 1], [], []>} : vector<256x64xbf16>, vector<64x128xbf16>, vector<256x128xf32> -> vector<256x128xf32>
    %c0_4 = arith.constant 0 : index
    %c0_5 = arith.constant 0 : index
    %4 = vector.load %arg6[%c0_4, %c0_5] : memref<4x128xf32, #tpu.memory_space<vmem>>, vector<1x128xf32>
    %5 = vector.broadcast %4 : vector<1x128xf32> to vector<256x128xf32>
    %6 = arith.addf %3, %5 : vector<256x128xf32>
    %cst_6 = arith.constant 0.000000e+00 : f32
    %7 = vector.broadcast %cst_6 : f32 to vector<256x128xf32>
    %8 = arith.maximumf %6, %7 : vector<256x128xf32>
    %9 = arith.truncf %8 : vector<256x128xf32> to vector<256x128xbf16>
    %c0_7 = arith.constant 0 : index
    %c0_8 = arith.constant 0 : index
    %c0_9 = arith.constant 0 : index
    %10 = vector.load %arg7[%c0_7, %c0_8, %c0_9] : memref<1x256x128xbf16, #tpu.memory_space<vmem>>, vector<1x256x128xbf16>
    %11 = vector.shape_cast %10 : vector<1x256x128xbf16> to vector<256x128xbf16>
    %12 = vector.shape_cast %9 : vector<256x128xbf16> to vector<1x256x128xbf16>
    tpu.vector_store %arg7[%c0_7, %c0_8, %c0_9], %12 {strides = array<i32>} : memref<1x256x128xbf16, #tpu.memory_space<vmem>>, vector<1x256x128xbf16>,
    %13 = vector.extract_strided_slice %9 {offsets = [0, 0], sizes = [64, 128], strides = [1, 1]} : vector<256x128xbf16> to vector<64x128xbf16>
    %c0_10 = arith.constant 0 : index
    %c0_11 = arith.constant 0 : index
    %14 = vector.load %arg11[%c0_10, %c0_11] : memref<64x512xbf16, #tpu.memory_space<vmem>>, vector<64x128xbf16>
    tpu.vector_store %arg11[%c0_10, %c0_11], %13 {strides = array<i32>} : memref<64x512xbf16, #tpu.memory_space<vmem>>, vector<64x128xbf16>,
    %15 = vector.extract_strided_slice %9 {offsets = [64, 0], sizes = [64, 128], strides = [1, 1]} : vector<256x128xbf16> to vector<64x128xbf16>
    %c0_12 = arith.constant 0 : index
    %c128 = arith.constant 128 : index
    %16 = vector.load %arg11[%c0_12, %c128] : memref<64x512xbf16, #tpu.memory_space<vmem>>, vector<64x128xbf16>
    tpu.vector_store %arg11[%c0_12, %c128], %15 {strides = array<i32>} : memref<64x512xbf16, #tpu.memory_space<vmem>>, vector<64x128xbf16>,
    %17 = vector.extract_strided_slice %9 {offsets = [128, 0], sizes = [64, 128], strides = [1, 1]} : vector<256x128xbf16> to vector<64x128xbf16>
    %c0_13 = arith.constant 0 : index
    %c256 = arith.constant 256 : index
    %18 = vector.load %arg11[%c0_13, %c256] : memref<64x512xbf16, #tpu.memory_space<vmem>>, vector<64x128xbf16>
    tpu.vector_store %arg11[%c0_13, %c256], %17 {strides = array<i32>} : memref<64x512xbf16, #tpu.memory_space<vmem>>, vector<64x128xbf16>,
    %19 = vector.extract_strided_slice %9 {offsets = [192, 0], sizes = [64, 128], strides = [1, 1]} : vector<256x128xbf16> to vector<64x128xbf16>
    %c0_14 = arith.constant 0 : index
    %c384 = arith.constant 384 : index
    %20 = vector.load %arg11[%c0_14, %c384] : memref<64x512xbf16, #tpu.memory_space<vmem>>, vector<64x128xbf16>
    tpu.vector_store %arg11[%c0_14, %c384], %19 {strides = array<i32>} : memref<64x512xbf16, #tpu.memory_space<vmem>>, vector<64x128xbf16>,
    %c0_15 = arith.constant 0 : index
    %c0_16 = arith.constant 0 : index
    %21 = vector.load %arg11[%c0_15, %c0_16] : memref<64x512xbf16, #tpu.memory_space<vmem>>, vector<64x512xbf16>
    %c0_17 = arith.constant 0 : index
    %c0_18 = arith.constant 0 : index
    %22 = vector.load %arg3[%c0_17, %c0_18] : memref<512x128xbf16, #tpu.memory_space<vmem>>, vector<512x128xbf16>
    %cst_19 = arith.constant dense<0.000000e+00> : vector<64x128xf32>
    %23 = tpu.matmul %21, %22, %cst_19 {dimension_numbers = #tpu.dot_dimension_numbers<[1], [0], [0], [1], [0, 0, 1, 1], [], []>} : vector<64x512xbf16>, vector<512x128xbf16>, vector<64x128xf32> -> vector<64x128xf32>
    %c1 = arith.constant 1 : index
    %c0_20 = arith.constant 0 : index
    %24 = vector.load %arg6[%c1, %c0_20] : memref<4x128xf32, #tpu.memory_space<vmem>>, vector<1x128xf32>
    %25 = vector.broadcast %24 : vector<1x128xf32> to vector<64x128xf32>
    %26 = arith.addf %23, %25 : vector<64x128xf32>
    %cst_21 = arith.constant 0.000000e+00 : f32
    %27 = vector.broadcast %cst_21 : f32 to vector<64x128xf32>
    %28 = arith.maximumf %26, %27 : vector<64x128xf32>
    %29 = arith.truncf %28 : vector<64x128xf32> to vector<64x128xbf16>
    %c0_22 = arith.constant 0 : index
    %c0_23 = arith.constant 0 : index
    %c0_24 = arith.constant 0 : index
    %30 = vector.load %arg8[%c0_22, %c0_23, %c0_24] : memref<1x64x128xbf16, #tpu.memory_space<vmem>>, vector<1x64x128xbf16>
    %31 = vector.shape_cast %30 : vector<1x64x128xbf16> to vector<64x128xbf16>
    %32 = vector.shape_cast %29 : vector<64x128xbf16> to vector<1x64x128xbf16>
    tpu.vector_store %arg8[%c0_22, %c0_23, %c0_24], %32 {strides = array<i32>} : memref<1x64x128xbf16, #tpu.memory_space<vmem>>, vector<1x64x128xbf16>,
    %33 = vector.extract_strided_slice %29 {offsets = [0, 0], sizes = [16, 128], strides = [1, 1]} : vector<64x128xbf16> to vector<16x128xbf16>
    %c0_25 = arith.constant 0 : index
    %c0_26 = arith.constant 0 : index
    %34 = vector.load %arg12[%c0_25, %c0_26] : memref<16x512xbf16, #tpu.memory_space<vmem>>, vector<16x128xbf16>
    tpu.vector_store %arg12[%c0_25, %c0_26], %33 {strides = array<i32>} : memref<16x512xbf16, #tpu.memory_space<vmem>>, vector<16x128xbf16>,
    %35 = vector.extract_strided_slice %29 {offsets = [16, 0], sizes = [16, 128], strides = [1, 1]} : vector<64x128xbf16> to vector<16x128xbf16>
    %c0_27 = arith.constant 0 : index
    %c128_28 = arith.constant 128 : index
    %36 = vector.load %arg12[%c0_27, %c128_28] : memref<16x512xbf16, #tpu.memory_space<vmem>>, vector<16x128xbf16>
    tpu.vector_store %arg12[%c0_27, %c128_28], %35 {strides = array<i32>} : memref<16x512xbf16, #tpu.memory_space<vmem>>, vector<16x128xbf16>,
    %37 = vector.extract_strided_slice %29 {offsets = [32, 0], sizes = [16, 128], strides = [1, 1]} : vector<64x128xbf16> to vector<16x128xbf16>
    %c0_29 = arith.constant 0 : index
    %c256_30 = arith.constant 256 : index
    %38 = vector.load %arg12[%c0_29, %c256_30] : memref<16x512xbf16, #tpu.memory_space<vmem>>, vector<16x128xbf16>
    tpu.vector_store %arg12[%c0_29, %c256_30], %37 {strides = array<i32>} : memref<16x512xbf16, #tpu.memory_space<vmem>>, vector<16x128xbf16>,
    %39 = vector.extract_strided_slice %29 {offsets = [48, 0], sizes = [16, 128], strides = [1, 1]} : vector<64x128xbf16> to vector<16x128xbf16>
    %c0_31 = arith.constant 0 : index
    %c384_32 = arith.constant 384 : index
    %40 = vector.load %arg12[%c0_31, %c384_32] : memref<16x512xbf16, #tpu.memory_space<vmem>>, vector<16x128xbf16>
    tpu.vector_store %arg12[%c0_31, %c384_32], %39 {strides = array<i32>} : memref<16x512xbf16, #tpu.memory_space<vmem>>, vector<16x128xbf16>,
    %c0_33 = arith.constant 0 : index
    %c0_34 = arith.constant 0 : index
    %41 = vector.load %arg12[%c0_33, %c0_34] : memref<16x512xbf16, #tpu.memory_space<vmem>>, vector<16x512xbf16>
    %c0_35 = arith.constant 0 : index
    %c0_36 = arith.constant 0 : index
    %42 = vector.load %arg4[%c0_35, %c0_36] : memref<512x128xbf16, #tpu.memory_space<vmem>>, vector<512x128xbf16>
    %cst_37 = arith.constant dense<0.000000e+00> : vector<16x128xf32>
    %43 = tpu.matmul %41, %42, %cst_37 {dimension_numbers = #tpu.dot_dimension_numbers<[1], [0], [0], [1], [0, 0, 1, 1], [], []>} : vector<16x512xbf16>, vector<512x128xbf16>, vector<16x128xf32> -> vector<16x128xf32>
    %c2 = arith.constant 2 : index
    %c0_38 = arith.constant 0 : index
    %44 = vector.load %arg6[%c2, %c0_38] : memref<4x128xf32, #tpu.memory_space<vmem>>, vector<1x128xf32>
    %45 = vector.broadcast %44 : vector<1x128xf32> to vector<16x128xf32>
    %46 = arith.addf %43, %45 : vector<16x128xf32>
    %cst_39 = arith.constant 0.000000e+00 : f32
    %47 = vector.broadcast %cst_39 : f32 to vector<16x128xf32>
    %48 = arith.maximumf %46, %47 : vector<16x128xf32>
    %49 = arith.truncf %48 : vector<16x128xf32> to vector<16x128xbf16>
    %c0_40 = arith.constant 0 : index
    %c0_41 = arith.constant 0 : index
    %c0_42 = arith.constant 0 : index
    %50 = vector.load %arg9[%c0_40, %c0_41, %c0_42] : memref<1x16x128xbf16, #tpu.memory_space<vmem>>, vector<1x16x128xbf16>
    %51 = vector.shape_cast %50 : vector<1x16x128xbf16> to vector<16x128xbf16>
    %52 = vector.shape_cast %49 : vector<16x128xbf16> to vector<1x16x128xbf16>
    tpu.vector_store %arg9[%c0_40, %c0_41, %c0_42], %52 {strides = array<i32>} : memref<1x16x128xbf16, #tpu.memory_space<vmem>>, vector<1x16x128xbf16>,
    %53 = vector.extract_strided_slice %49 {offsets = [0, 0], sizes = [4, 128], strides = [1, 1]} : vector<16x128xbf16> to vector<4x128xbf16>
    %c0_43 = arith.constant 0 : index
    %c0_44 = arith.constant 0 : index
    %54 = vector.load %arg13[%c0_43, %c0_44] : memref<4x512xbf16, #tpu.memory_space<vmem>>, vector<4x128xbf16>
    tpu.vector_store %arg13[%c0_43, %c0_44], %53 {strides = array<i32>} : memref<4x512xbf16, #tpu.memory_space<vmem>>, vector<4x128xbf16>,
    %55 = vector.extract_strided_slice %49 {offsets = [4, 0], sizes = [4, 128], strides = [1, 1]} : vector<16x128xbf16> to vector<4x128xbf16>
    %c0_45 = arith.constant 0 : index
    %c128_46 = arith.constant 128 : index
    %56 = vector.load %arg13[%c0_45, %c128_46] : memref<4x512xbf16, #tpu.memory_space<vmem>>, vector<4x128xbf16>
    tpu.vector_store %arg13[%c0_45, %c128_46], %55 {strides = array<i32>} : memref<4x512xbf16, #tpu.memory_space<vmem>>, vector<4x128xbf16>,
    %57 = vector.extract_strided_slice %49 {offsets = [8, 0], sizes = [4, 128], strides = [1, 1]} : vector<16x128xbf16> to vector<4x128xbf16>
    %c0_47 = arith.constant 0 : index
    %c256_48 = arith.constant 256 : index
    %58 = vector.load %arg13[%c0_47, %c256_48] : memref<4x512xbf16, #tpu.memory_space<vmem>>, vector<4x128xbf16>
    tpu.vector_store %arg13[%c0_47, %c256_48], %57 {strides = array<i32>} : memref<4x512xbf16, #tpu.memory_space<vmem>>, vector<4x128xbf16>,
    %59 = vector.extract_strided_slice %49 {offsets = [12, 0], sizes = [4, 128], strides = [1, 1]} : vector<16x128xbf16> to vector<4x128xbf16>
    %c0_49 = arith.constant 0 : index
    %c384_50 = arith.constant 384 : index
    %60 = vector.load %arg13[%c0_49, %c384_50] : memref<4x512xbf16, #tpu.memory_space<vmem>>, vector<4x128xbf16>
    tpu.vector_store %arg13[%c0_49, %c384_50], %59 {strides = array<i32>} : memref<4x512xbf16, #tpu.memory_space<vmem>>, vector<4x128xbf16>,
    %c0_51 = arith.constant 0 : index
    %c0_52 = arith.constant 0 : index
    %61 = vector.load %arg13[%c0_51, %c0_52] : memref<4x512xbf16, #tpu.memory_space<vmem>>, vector<4x512xbf16>
    %c0_53 = arith.constant 0 : index
    %c0_54 = arith.constant 0 : index
    %62 = vector.load %arg5[%c0_53, %c0_54] : memref<512x128xbf16, #tpu.memory_space<vmem>>, vector<512x128xbf16>
    %cst_55 = arith.constant dense<0.000000e+00> : vector<4x128xf32>
    %63 = tpu.matmul %61, %62, %cst_55 {dimension_numbers = #tpu.dot_dimension_numbers<[1], [0], [0], [1], [0, 0, 1, 1], [], []>} : vector<4x512xbf16>, vector<512x128xbf16>, vector<4x128xf32> -> vector<4x128xf32>
    %c3 = arith.constant 3 : index
    %c0_56 = arith.constant 0 : index
    %64 = vector.load %arg6[%c3, %c0_56] : memref<4x128xf32, #tpu.memory_space<vmem>>, vector<1x128xf32>
    %65 = vector.broadcast %64 : vector<1x128xf32> to vector<4x128xf32>
    %66 = arith.addf %63, %65 : vector<4x128xf32>
    %cst_57 = arith.constant 0.000000e+00 : f32
    %67 = vector.broadcast %cst_57 : f32 to vector<4x128xf32>
    %68 = arith.maximumf %66, %67 : vector<4x128xf32>
    %69 = arith.truncf %68 : vector<4x128xf32> to vector<4x128xbf16>
    %c0_58 = arith.constant 0 : index
    %c0_59 = arith.constant 0 : index
    %c0_60 = arith.constant 0 : index
    %70 = vector.load %arg10[%c0_58, %c0_59, %c0_60] : memref<1x4x128xbf16, #tpu.memory_space<vmem>>, vector<1x4x128xbf16>
    %71 = vector.shape_cast %70 : vector<1x4x128xbf16> to vector<4x128xbf16>
    %72 = vector.shape_cast %69 : vector<4x128xbf16> to vector<1x4x128xbf16>
    tpu.vector_store %arg10[%c0_58, %c0_59, %c0_60], %72 {strides = array<i32>} : memref<1x4x128xbf16, #tpu.memory_space<vmem>>, vector<1x4x128xbf16>,
    return
  }
  func.func @transform_0(%arg0: i32) -> (i32, i32, i32) {
    %c0_i32 = arith.constant 0 : i32
    %c0_i32_0 = arith.constant 0 : i32
    %c0_i32_1 = arith.constant 0 : i32
    return %arg0, %c0_i32, %c0_i32_0 : i32, i32, i32
  }
  func.func @transform_1(%arg0: i32) -> (i32, i32) {
    %c0_i32 = arith.constant 0 : i32
    %c0_i32_0 = arith.constant 0 : i32
    %c0_i32_1 = arith.constant 0 : i32
    return %c0_i32, %c0_i32_0 : i32, i32
  }
  func.func @transform_2(%arg0: i32) -> (i32, i32) {
    %c0_i32 = arith.constant 0 : i32
    %c0_i32_0 = arith.constant 0 : i32
    %c0_i32_1 = arith.constant 0 : i32
    return %c0_i32, %c0_i32_0 : i32, i32
  }
  func.func @transform_3(%arg0: i32) -> (i32, i32) {
    %c0_i32 = arith.constant 0 : i32
    %c0_i32_0 = arith.constant 0 : i32
    %c0_i32_1 = arith.constant 0 : i32
    return %c0_i32, %c0_i32_0 : i32, i32
  }
  func.func @transform_4(%arg0: i32) -> (i32, i32) {
    %c0_i32 = arith.constant 0 : i32
    %c0_i32_0 = arith.constant 0 : i32
    %c0_i32_1 = arith.constant 0 : i32
    return %c0_i32, %c0_i32_0 : i32, i32
  }
  func.func @transform_5(%arg0: i32) -> (i32, i32) {
    %c0_i32 = arith.constant 0 : i32
    %c0_i32_0 = arith.constant 0 : i32
    %c0_i32_1 = arith.constant 0 : i32
    return %c0_i32, %c0_i32_0 : i32, i32
  }
  func.func @transform_6(%arg0: i32) -> (i32, i32, i32) {
    %c0_i32 = arith.constant 0 : i32
    %c0_i32_0 = arith.constant 0 : i32
    %c0_i32_1 = arith.constant 0 : i32
    return %arg0, %c0_i32, %c0_i32_0 : i32, i32, i32
  }
  func.func @transform_7(%arg0: i32) -> (i32, i32, i32) {
    %c0_i32 = arith.constant 0 : i32
    %c0_i32_0 = arith.constant 0 : i32
    %c0_i32_1 = arith.constant 0 : i32
    return %arg0, %c0_i32, %c0_i32_0 : i32, i32, i32
  }
  func.func @transform_8(%arg0: i32) -> (i32, i32, i32) {
    %c0_i32 = arith.constant 0 : i32
    %c0_i32_0 = arith.constant 0 : i32
    %c0_i32_1 = arith.constant 0 : i32
    return %arg0, %c0_i32, %c0_i32_0 : i32, i32, i32
  }
  func.func @transform_9(%arg0: i32) -> (i32, i32, i32) {
    %c0_i32 = arith.constant 0 : i32
    %c0_i32_0 = arith.constant 0 : i32
    %c0_i32_1 = arith.constant 0 : i32
    return %arg0, %c0_i32, %c0_i32_0 : i32, i32, i32
  }
}

</mosaic_0001>

<llo_original>
// kernel: forward.1
$region0: #{forward.1}
  #allocation0 [shape = 'u32[]', space=smem, size = 0x4, offset = 0x4, fixed_abs, tag = 'smem constant byte address 0x4 - core index']
  #allocation1 [shape = 'u32[144,128]{1,0:T(1,128)}', space=vmem, size = 0x12000, scoped, tag = 'internal scratch']
  #allocation2 [shape = 'bf16[64,512]{1,0:T(8,128)(2,1)}', space=vmem, size = 0x10000, scoped, tag = 'scratch operand']
  #allocation3 [shape = 'bf16[16,512]{1,0:T(8,128)(2,1)}', space=vmem, size = 0x4000, scoped, tag = 'scratch operand']
  #allocation4 [shape = 'bf16[4,512]{1,0:T(4,128)(2,1)}', space=vmem, size = 0x1000, scoped, tag = 'scratch operand']
  %s0 = inlined_call_operand.vmem [shape: bf16[2,256,64], index: 0, kind: input, shape index: {}]
  %s1 = inlined_call_operand.vmem [shape: bf16[64,128], index: 1, kind: input, shape index: {}]
  %s2 = inlined_call_operand.vmem [shape: bf16[512,128], index: 2, kind: input, shape index: {}]
  %s3 = inlined_call_operand.vmem [shape: bf16[512,128], index: 3, kind: input, shape index: {}]
  %s4 = inlined_call_operand.vmem [shape: bf16[512,128], index: 4, kind: input, shape index: {}]
  %s5 = inlined_call_operand.vmem [shape: f32[4,128], index: 5, kind: input, shape index: {}]
  %s6 = inlined_call_operand.vmem [shape: bf16[2,256,128], index: 6, kind: output, shape index: {0}]
  %s7 = inlined_call_operand.vmem [shape: bf16[2,64,128], index: 7, kind: output, shape index: {1}]
  %s8 = inlined_call_operand.vmem [shape: bf16[2,16,128], index: 8, kind: output, shape index: {2}]
  %s9 = inlined_call_operand.vmem [shape: bf16[2,4,128], index: 9, kind: output, shape index: {3}]
  %10 = xla_tuple %s6, %s7, %s8, %s9
  %s11 = sld [smem:[#allocation0]]
  $region81: #{forward.1} parent=0
    _
  %s13 = ssub.s32 1, %s11
  %s14 = scalar_select 0, %s13, %s11
  loop: start=0, step=1, limit=4
  $region2: #{forward.1} parent=0 // loop_pre_header
    _
  $region3: #{forward.1} parent=0 // loop_header
    %s16 = sphi 0, %s20
    %p17 = scmp.ge.s32.totalorder %s16, 4
    %s26 = sphi 0, %s28
    %s29 = sphi 0, %s26
    %s30 = sphi 0, %s29
    %s46 = sphi 0, %s30
    %s50 = sphi 0, %s50
    %s52 = sphi 0, %s50
    %s53 = sphi 0, %s52
    %s67 = sphi 0, %s53
    %s71 = sphi 0, %s71
    %s73 = sphi 0, %s71
    %s74 = sphi 0, %s73
    %s88 = sphi 0, %s74
    %s92 = sphi 0, %s92
    %s94 = sphi 0, %s92
    %s95 = sphi 0, %s94
    %s109 = sphi 0, %s95
    %s113 = sphi 0, %s113
    %s115 = sphi 0, %s113
    %s116 = sphi 0, %s115
    %s130 = sphi 0, %s116
    %s134 = sphi 0, %s134
    %s136 = sphi 0, %s134
    %s137 = sphi 0, %s136
    %s151 = sphi 0, %s137
    %s157 = sphi 0, %s159
    %s160 = sphi 0, %s157
    %s161 = sphi 0, %s160
    %s177 = sphi 0, %s161
    %s183 = sphi 0, %s185
    %s186 = sphi 0, %s183
    %s187 = sphi 0, %s186
    %s203 = sphi 0, %s187
    %s209 = sphi 0, %s211
    %s212 = sphi 0, %s209
    %s213 = sphi 0, %s212
    %s229 = sphi 0, %s213
    %s235 = sphi 0, %s237
    %s238 = sphi 0, %s235
    %s239 = sphi 0, %s238
    %s255 = sphi 0, %s239
  $region4: #{forward.1} parent=0 // loop_header_branch
    %19 = sbr.rel (%p17) target = $region8
  $region5: #{forward.1} parent=0 // loop_body
    %s21 = ssub.s32 %s16, 1
    %s22 = ssub.s32 %s16, 2
    %s23 = sadd.s32 %s16, 1
    %s24 = ssub.s32 %s16, %s23
    %p25 = scmp.eq.s32.totalorder %s24, 0
    %s27 = sadd.s32 %s26, 1
    %s28 = scalar_select %p25, %s26, %s27
    %p31 = pneg %p25
    %p32 = scmp.eq.s32.totalorder %s16, 1
    %p33 = por %p31, %p32
    %p34 = scmp.ne.s32.totalorder %s26, %s29
    %p35 = scmp.eq.s32.totalorder %s16, 0
    %p36 = por %p34, %p35
    %p37 = scmp.ne.s32.totalorder %s26, %s29
    %p38 = scmp.eq.s32.totalorder %s21, 1
    %p39 = por %p37, %p38
    %p40 = scmp.ne.s32.totalorder %s29, %s30
    %p41 = scmp.eq.s32.totalorder %s21, 0
    %p42 = por %p40, %p41
    %p43 = scmp.ne.s32.totalorder %s29, %s30
    %p44 = scmp.eq.s32.totalorder %s22, 1
    %p45 = por %p43, %p44
    %p47 = scmp.ne.s32.totalorder %s30, %s46
    %p48 = scmp.eq.s32.totalorder %s22, 0
    %p49 = por %p47, %p48
    %s51 = sadd.s32 %s50, 1
    %p54 = scmp.eq.s32.totalorder %s16, 1
    %p55 = scmp.ne.s32.totalorder %s50, %s52
    %p56 = scmp.eq.s32.totalorder %s16, 0
    %p57 = por %p55, %p56
    %p58 = scmp.ne.s32.totalorder %s50, %s52
    %p59 = scmp.eq.s32.totalorder %s21, 1
    %p60 = por %p58, %p59
    %p61 = scmp.ne.s32.totalorder %s52, %s53
    %p62 = scmp.eq.s32.totalorder %s21, 0
    %p63 = por %p61, %p62
    %p64 = scmp.ne.s32.totalorder %s52, %s53
    %p65 = scmp.eq.s32.totalorder %s22, 1
    %p66 = por %p64, %p65
    %p68 = scmp.ne.s32.totalorder %s53, %s67
    %p69 = scmp.eq.s32.totalorder %s22, 0
    %p70 = por %p68, %p69
    %s72 = sadd.s32 %s71, 1
    %p75 = scmp.eq.s32.totalorder %s16, 1
    %p76 = scmp.ne.s32.totalorder %s71, %s73
    %p77 = scmp.eq.s32.totalorder %s16, 0
    %p78 = por %p76, %p77
    %p79 = scmp.ne.s32.totalorder %s71, %s73
    %p80 = scmp.eq.s32.totalorder %s21, 1
    %p81 = por %p79, %p80
    %p82 = scmp.ne.s32.totalorder %s73, %s74
    %p83 = scmp.eq.s32.totalorder %s21, 0
    %p84 = por %p82, %p83
    %p85 = scmp.ne.s32.totalorder %s73, %s74
    %p86 = scmp.eq.s32.totalorder %s22, 1
    %p87 = por %p85, %p86
    %p89 = scmp.ne.s32.totalorder %s74, %s88
    %p90 = scmp.eq.s32.totalorder %s22, 0
    %p91 = por %p89, %p90
    %s93 = sadd.s32 %s92, 1
    %p96 = scmp.eq.s32.totalorder %s16, 1
    %p97 = scmp.ne.s32.totalorder %s92, %s94
    %p98 = scmp.eq.s32.totalorder %s16, 0
    %p99 = por %p97, %p98
    %p100 = scmp.ne.s32.totalorder %s92, %s94
    %p101 = scmp.eq.s32.totalorder %s21, 1
    %p102 = por %p100, %p101
    %p103 = scmp.ne.s32.totalorder %s94, %s95
    %p104 = scmp.eq.s32.totalorder %s21, 0
    %p105 = por %p103, %p104
    %p106 = scmp.ne.s32.totalorder %s94, %s95
    %p107 = scmp.eq.s32.totalorder %s22, 1
    %p108 = por %p106, %p107
    %p110 = scmp.ne.s32.totalorder %s95, %s109
    %p111 = scmp.eq.s32.totalorder %s22, 0
    %p112 = por %p110, %p111
    %s114 = sadd.s32 %s113, 1
    %p117 = scmp.eq.s32.totalorder %s16, 1
    %p118 = scmp.ne.s32.totalorder %s113, %s115
    %p119 = scmp.eq.s32.totalorder %s16, 0
    %p120 = por %p118, %p119
    %p121 = scmp.ne.s32.totalorder %s113, %s115
    %p122 = scmp.eq.s32.totalorder %s21, 1
    %p123 = por %p121, %p122
    %p124 = scmp.ne.s32.totalorder %s115, %s116
    %p125 = scmp.eq.s32.totalorder %s21, 0
    %p126 = por %p124, %p125
    %p127 = scmp.ne.s32.totalorder %s115, %s116
    %p128 = scmp.eq.s32.totalorder %s22, 1
    %p129 = por %p127, %p128
    %p131 = scmp.ne.s32.totalorder %s116, %s130
    %p132 = scmp.eq.s32.totalorder %s22, 0
    %p133 = por %p131, %p132
    %s135 = sadd.s32 %s134, 1
    %p138 = scmp.eq.s32.totalorder %s16, 1
    %p139 = scmp.ne.s32.totalorder %s134, %s136
    %p140 = scmp.eq.s32.totalorder %s16, 0
    %p141 = por %p139, %p140
    %p142 = scmp.ne.s32.totalorder %s134, %s136
    %p143 = scmp.eq.s32.totalorder %s21, 1
    %p144 = por %p142, %p143
    %p145 = scmp.ne.s32.totalorder %s136, %s137
    %p146 = scmp.eq.s32.totalorder %s21, 0
    %p147 = por %p145, %p146
    %p148 = scmp.ne.s32.totalorder %s136, %s137
    %p149 = scmp.eq.s32.totalorder %s22, 1
    %p150 = por %p148, %p149
    %p152 = scmp.ne.s32.totalorder %s137, %s151
    %p153 = scmp.eq.s32.totalorder %s22, 0
    %p154 = por %p152, %p153
    %s155 = ssub.s32 %s16, %s23
    %p156 = scmp.eq.s32.totalorder %s155, 0
    %s158 = sadd.s32 %s157, 1
    %s159 = scalar_select %p156, %s157, %s158
    %p162 = pneg %p156
    %p163 = scmp.eq.s32.totalorder %s16, 1
    %p164 = por %p162, %p163
    %p165 = scmp.ne.s32.totalorder %s157, %s160
    %p166 = scmp.eq.s32.totalorder %s16, 0
    %p167 = por %p165, %p166
    %p168 = scmp.ne.s32.totalorder %s157, %s160
    %p169 = scmp.eq.s32.totalorder %s21, 1
    %p170 = por %p168, %p169
    %p171 = scmp.ne.s32.totalorder %s160, %s161
    %p172 = scmp.eq.s32.totalorder %s21, 0
    %p173 = por %p171, %p172
    %p174 = scmp.ne.s32.totalorder %s160, %s161
    %p175 = scmp.eq.s32.totalorder %s22, 1
    %p176 = por %p174, %p175
    %p178 = scmp.ne.s32.totalorder %s161, %s177
    %p179 = scmp.eq.s32.totalorder %s22, 0
    %p180 = por %p178, %p179
    %s181 = ssub.s32 %s16, %s23
    %p182 = scmp.eq.s32.totalorder %s181, 0
    %s184 = sadd.s32 %s183, 1
    %s185 = scalar_select %p182, %s183, %s184
    %p188 = pneg %p182
    %p189 = scmp.eq.s32.totalorder %s16, 1
    %p190 = por %p188, %p189
    %p191 = scmp.ne.s32.totalorder %s183, %s186
    %p192 = scmp.eq.s32.totalorder %s16, 0
    %p193 = por %p191, %p192
    %p194 = scmp.ne.s32.totalorder %s183, %s186
    %p195 = scmp.eq.s32.totalorder %s21, 1
    %p196 = por %p194, %p195
    %p197 = scmp.ne.s32.totalorder %s186, %s187
    %p198 = scmp.eq.s32.totalorder %s21, 0
    %p199 = por %p197, %p198
    %p200 = scmp.ne.s32.totalorder %s186, %s187
    %p201 = scmp.eq.s32.totalorder %s22, 1
    %p202 = por %p200, %p201
    %p204 = scmp.ne.s32.totalorder %s187, %s203
    %p205 = scmp.eq.s32.totalorder %s22, 0
    %p206 = por %p204, %p205
    %s207 = ssub.s32 %s16, %s23
    %p208 = scmp.eq.s32.totalorder %s207, 0
    %s210 = sadd.s32 %s209, 1
    %s211 = scalar_select %p208, %s209, %s210
    %p214 = pneg %p208
    %p215 = scmp.eq.s32.totalorder %s16, 1
    %p216 = por %p214, %p215
    %p217 = scmp.ne.s32.totalorder %s209, %s212
    %p218 = scmp.eq.s32.totalorder %s16, 0
    %p219 = por %p217, %p218
    %p220 = scmp.ne.s32.totalorder %s209, %s212
    %p221 = scmp.eq.s32.totalorder %s21, 1
    %p222 = por %p220, %p221
    %p223 = scmp.ne.s32.totalorder %s212, %s213
    %p224 = scmp.eq.s32.totalorder %s21, 0
    %p225 = por %p223, %p224
    %p226 = scmp.ne.s32.totalorder %s212, %s213
    %p227 = scmp.eq.s32.totalorder %s22, 1
    %p228 = por %p226, %p227
    %p230 = scmp.ne.s32.totalorder %s213, %s229
    %p231 = scmp.eq.s32.totalorder %s22, 0
    %p232 = por %p230, %p231
    %s233 = ssub.s32 %s16, %s23
    %p234 = scmp.eq.s32.totalorder %s233, 0
    %s236 = sadd.s32 %s235, 1
    %s237 = scalar_select %p234, %s235, %s236
    %p240 = pneg %p234
    %p241 = scmp.eq.s32.totalorder %s16, 1
    %p242 = por %p240, %p241
    %p243 = scmp.ne.s32.totalorder %s235, %s238
    %p244 = scmp.eq.s32.totalorder %s16, 0
    %p245 = por %p243, %p244
    %p246 = scmp.ne.s32.totalorder %s235, %s238
    %p247 = scmp.eq.s32.totalorder %s21, 1
    %p248 = por %p246, %p247
    %p249 = scmp.ne.s32.totalorder %s238, %s239
    %p250 = scmp.eq.s32.totalorder %s21, 0
    %p251 = por %p249, %p250
    %p252 = scmp.ne.s32.totalorder %s238, %s239
    %p253 = scmp.eq.s32.totalorder %s22, 1
    %p254 = por %p252, %p253
    %p256 = scmp.ne.s32.totalorder %s239, %s255
    %p257 = scmp.eq.s32.totalorder %s22, 0
    %p258 = por %p256, %p257
    %p259 = scmp.le.s32.totalorder 1, %s16
    %p260 = scmp.lt.s32.totalorder %s16, 3
    %p261 = pnand %p259, %p260
    %p262 = pneg %p261
    // Predicated region
    $region9: #{forward.1} parent=5 // pred_check
      _
    $region10: #{forward.1} parent=5 // pred_check_branch
      %264 = sbr.rel (%p261) target = $region12
    $region11: #{forward.1} parent=5 // pred_region
      %s265 = ssub.s32 %s16, 1
      // Predicated region
      $region13: #{forward.1} parent=11 // pred_check
        %p266 = pneg %p63
      $region14: #{forward.1} parent=11 // pred_check_branch
        %268 = sbr.rel (%p266) target = $region16
      $region15: #{forward.1} parent=11 // pred_region
        _
      $region16: #{forward.1} parent=11 // pred_fallthru
        _
      // Predicated region
      $region17: #{forward.1} parent=11 // pred_check
        %p269 = pneg %p84
      $region18: #{forward.1} parent=11 // pred_check_branch
        %271 = sbr.rel (%p269) target = $region20
      $region19: #{forward.1} parent=11 // pred_region
        _
      $region20: #{forward.1} parent=11 // pred_fallthru
        _
      // Predicated region
      $region21: #{forward.1} parent=11 // pred_check
        %p272 = pneg %p105
      $region22: #{forward.1} parent=11 // pred_check_branch
        %274 = sbr.rel (%p272) target = $region24
      $region23: #{forward.1} parent=11 // pred_region
        _
      $region24: #{forward.1} parent=11 // pred_fallthru
        _
      // Predicated region
      $region25: #{forward.1} parent=11 // pred_check
        %p275 = pneg %p126
      $region26: #{forward.1} parent=11 // pred_check_branch
        %277 = sbr.rel (%p275) target = $region28
      $region27: #{forward.1} parent=11 // pred_region
        _
      $region28: #{forward.1} parent=11 // pred_fallthru
        _
      // Predicated region
      $region29: #{forward.1} parent=11 // pred_check
        %p278 = pneg %p147
      $region30: #{forward.1} parent=11 // pred_check_branch
        %280 = sbr.rel (%p278) target = $region32
      $region31: #{forward.1} parent=11 // pred_region
        _
      $region32: #{forward.1} parent=11 // pred_fallthru
        _
    $region12: #{forward.1} parent=5 // pred_fallthru
      _
    %p281 = scmp.lt.s32.totalorder %s16, 2
    // Predicated region
    $region33: #{forward.1} parent=5 // pred_check
      %p282 = pneg %p281
    $region34: #{forward.1} parent=5 // pred_check_branch
      %284 = sbr.rel (%p282) target = $region36
    $region35: #{forward.1} parent=5 // pred_region
      // Predicated region
      $region37: #{forward.1} parent=35 // pred_check
        %p285 = pneg %p36
      $region38: #{forward.1} parent=35 // pred_check_branch
        %287 = sbr.rel (%p285) target = $region40
      $region39: #{forward.1} parent=35 // pred_region
        %p288 = scmp.lt.s32.totalorder %s16, 1
        %s289 = scalar_select %p288, %s16, 1
        %s290 = smul.addr %s289, 32
        %s291 = smul.addr %s290, 4
        %s292 = scalar_lea.vmem %s0, %s291
      $region40: #{forward.1} parent=35 // pred_fallthru
        _
    $region36: #{forward.1} parent=5 // pred_fallthru
      _
    %p293 = scmp.le.s32.totalorder 1, %s16
    %p294 = scmp.lt.s32.totalorder %s16, 3
    %p295 = pnand %p293, %p294
    %p296 = pneg %p295
    // Predicated region
    $region41: #{forward.1} parent=5 // pred_check
      _
    $region42: #{forward.1} parent=5 // pred_check_branch
      %298 = sbr.rel (%p295) target = $region44
    $region43: #{forward.1} parent=5 // pred_region
      %s299 = ssub.s32 %s16, 1
      %p300 = scmp.lt.s32.totalorder %s21, 1
      %s301 = scalar_select %p300, %s21, 1
      %s302 = smul.addr %s301, 32
      %s303 = smul.addr %s302, 4
      %s304 = scalar_lea.vmem %s0, %s303
      %p305 = pneg %p42
      %p306 = pneg %p39
      %p307 = pneg %p63
      %p308 = pneg %p60
      %p309 = pneg %p84
      %p310 = pneg %p81
      %p311 = pneg %p105
      %p312 = pneg %p102
      %p313 = pneg %p126
      %p314 = pneg %p123
      %p315 = pneg %p147
      %p316 = pneg %p144
      %p317 = pneg %p173
      %p318 = pneg %p170
      %p319 = scmp.lt.s32.totalorder %s21, 1
      %s320 = scalar_select %p319, %s21, 1
      %s321 = smul.addr %s320, 32
      %s322 = smul.addr %s321, 4
      %s323 = scalar_lea.vmem %s6, %s322
      %p324 = pneg %p199
      %p325 = pneg %p196
      %p326 = scmp.lt.s32.totalorder %s21, 1
      %s327 = scalar_select %p326, %s21, 1
      %s328 = smul.addr %s327, 8
      %s329 = smul.addr %s328, 4
      %s330 = scalar_lea.vmem %s7, %s329
      %p331 = pneg %p225
      %p332 = pneg %p222
      %p333 = scmp.lt.s32.totalorder %s21, 1
      %s334 = scalar_select %p333, %s21, 1
      %s335 = smul.addr %s334, 2
      %s336 = smul.addr %s335, 4
      %s337 = scalar_lea.vmem %s8, %s336
      %p338 = pneg %p251
      %p339 = pneg %p248
      %p340 = scmp.lt.s32.totalorder %s21, 1
      %s341 = scalar_select %p340, %s21, 1
      %s342 = smul.addr %s341, 2
      %s343 = scalar_lea.vmem %s9, %s342
      %p344 = scmp.lt.s32.totalorder %s21, 1
      %s345 = scalar_select %p344, %s21, 1
      %s346 = smul.addr %s345, 32
      %s347 = smul.addr %s346, 4
      %s348 = scalar_lea.vmem %s0, %s347
      %p349 = scmp.lt.s32.totalorder %s21, 1
      %s350 = scalar_select %p349, %s21, 1
      %s351 = smul.addr %s350, 32
      %s352 = smul.addr %s351, 4
      %s353 = scalar_lea.vmem %s6, %s352
      %p354 = scmp.lt.s32.totalorder %s21, 1
      %s355 = scalar_select %p354, %s21, 1
      %s356 = smul.addr %s355, 8
      %s357 = smul.addr %s356, 4
      %s358 = scalar_lea.vmem %s7, %s357
      %p359 = scmp.lt.s32.totalorder %s21, 1
      %s360 = scalar_select %p359, %s21, 1
      %s361 = smul.addr %s360, 2
      %s362 = smul.addr %s361, 4
      %s363 = scalar_lea.vmem %s8, %s362
      %p364 = scmp.lt.s32.totalorder %s21, 1
      %s365 = scalar_select %p364, %s21, 1
      %s366 = smul.addr %s365, 2
      %s367 = scalar_lea.vmem %s9, %s366
      %v369 = vld [vmem:[%s348] sm:$0xf]
      %v370 = vld [vmem:[%s348 + $0x4] sm:$0xf]
      %v371 = vld [vmem:[%s348 + $0x8] sm:$0xf]
      %v372 = vld [vmem:[%s348 + $0xc] sm:$0xf]
      %v373 = vld [vmem:[%s348 + $0x10] sm:$0xf]
      %v374 = vld [vmem:[%s348 + $0x14] sm:$0xf]
      %v375 = vld [vmem:[%s348 + $0x18] sm:$0xf]
      %v376 = vld [vmem:[%s348 + $0x1c] sm:$0xf]
      %v377 = vld [vmem:[%s348 + $0x20] sm:$0xf]
      %v378 = vld [vmem:[%s348 + $0x24] sm:$0xf]
      %v379 = vld [vmem:[%s348 + $0x28] sm:$0xf]
      %v380 = vld [vmem:[%s348 + $0x2c] sm:$0xf]
      %v381 = vld [vmem:[%s348 + $0x30] sm:$0xf]
      %v382 = vld [vmem:[%s348 + $0x34] sm:$0xf]
      %v383 = vld [vmem:[%s348 + $0x38] sm:$0xf]
      %v384 = vld [vmem:[%s348 + $0x3c] sm:$0xf]
      %v385 = vld [vmem:[%s348 + $0x40] sm:$0xf]
      %v386 = vld [vmem:[%s348 + $0x44] sm:$0xf]
      %v387 = vld [vmem:[%s348 + $0x48] sm:$0xf]
      %v388 = vld [vmem:[%s348 + $0x4c] sm:$0xf]
      %v389 = vld [vmem:[%s348 + $0x50] sm:$0xf]
      %v390 = vld [vmem:[%s348 + $0x54] sm:$0xf]
      %v391 = vld [vmem:[%s348 + $0x58] sm:$0xf]
      %v392 = vld [vmem:[%s348 + $0x5c] sm:$0xf]
      %v393 = vld [vmem:[%s348 + $0x60] sm:$0xf]
      %v394 = vld [vmem:[%s348 + $0x64] sm:$0xf]
      %v395 = vld [vmem:[%s348 + $0x68] sm:$0xf]
      %v396 = vld [vmem:[%s348 + $0x6c] sm:$0xf]
      %v397 = vld [vmem:[%s348 + $0x70] sm:$0xf]
      %v398 = vld [vmem:[%s348 + $0x74] sm:$0xf]
      %v399 = vld [vmem:[%s348 + $0x78] sm:$0xf]
      %v400 = vld [vmem:[%s348 + $0x7c] sm:$0xf]
      %v401 = vld [vmem:[%s1] sm:$0xf]
      %v402 = vld [vmem:[%s1 + $0x4] sm:$0xf]
      %v403 = vld [vmem:[%s1 + $0x8] sm:$0xf]
      %v404 = vld [vmem:[%s1 + $0xc] sm:$0xf]
      %v405 = vld [vmem:[%s1 + $0x10] sm:$0xf]
      %v406 = vld [vmem:[%s1 + $0x14] sm:$0xf]
      %v407 = vld [vmem:[%s1 + $0x18] sm:$0xf]
      %v408 = vld [vmem:[%s1 + $0x1c] sm:$0xf]
      %v409 = vld [vmem:[%s5] sm:$0x1]
      %v410 = vlaneseq
      %v411 = vshrl.u32 %v410, 7
      %v412 = vsub.s32 0, %v411
      %v413 = vrot.slane %v409, %v412
      %v446 = vunpack.c.l.b16 %v369
      %v447 = vunpack.c.l.b16 %v370
      %v448 = vunpack.c.l.b16 %v371
      %v449 = vunpack.c.l.b16 %v372
      %v450 = vunpack.c.l.b16 %v373
      %v451 = vunpack.c.l.b16 %v374
      %v452 = vunpack.c.l.b16 %v375
      %v453 = vunpack.c.l.b16 %v376
      %v454 = vunpack.c.l.b16 %v377
      %v455 = vunpack.c.l.b16 %v378
      %v456 = vunpack.c.l.b16 %v379
      %v457 = vunpack.c.l.b16 %v380
      %v458 = vunpack.c.l.b16 %v381
      %v459 = vunpack.c.l.b16 %v382
      %v460 = vunpack.c.l.b16 %v383
      %v461 = vunpack.c.l.b16 %v384
      %v462 = vunpack.c.l.b16 %v385
      %v463 = vunpack.c.l.b16 %v386
      %v464 = vunpack.c.l.b16 %v387
      %v465 = vunpack.c.l.b16 %v388
      %v466 = vunpack.c.l.b16 %v389
      %v467 = vunpack.c.l.b16 %v390
      %v468 = vunpack.c.l.b16 %v391
      %v469 = vunpack.c.l.b16 %v392
      %v470 = vunpack.c.l.b16 %v393
      %v471 = vunpack.c.l.b16 %v394
      %v472 = vunpack.c.l.b16 %v395
      %v473 = vunpack.c.l.b16 %v396
      %v474 = vunpack.c.l.b16 %v397
      %v475 = vunpack.c.l.b16 %v398
      %v476 = vunpack.c.l.b16 %v399
      %v477 = vunpack.c.l.b16 %v400
      %v478 = vpack.c.b16 %v447, %v446
      %v479 = vpack.c.b16 %v449, %v448
      %v480 = vpack.c.b16 %v451, %v450
      %v481 = vpack.c.b16 %v453, %v452
      %v482 = vpack.c.b16 %v455, %v454
      %v483 = vpack.c.b16 %v457, %v456
      %v484 = vpack.c.b16 %v459, %v458
      %v485 = vpack.c.b16 %v461, %v460
      %v486 = vpack.c.b16 %v463, %v462
      %v487 = vpack.c.b16 %v465, %v464
      %v488 = vpack.c.b16 %v467, %v466
      %v489 = vpack.c.b16 %v469, %v468
      %v490 = vpack.c.b16 %v471, %v470
      %v491 = vpack.c.b16 %v473, %v472
      %v492 = vpack.c.b16 %v475, %v474
      %v493 = vpack.c.b16 %v477, %v476
      %v502 = vunpack.c.l.b16 %v401
      %v503 = vunpack.c.l.b16 %v402
      %v504 = vunpack.c.l.b16 %v403
      %v505 = vunpack.c.l.b16 %v404
      %v506 = vunpack.c.l.b16 %v405
      %v507 = vunpack.c.l.b16 %v406
      %v508 = vunpack.c.l.b16 %v407
      %v509 = vunpack.c.l.b16 %v408
      %v510 = vpack.c.b16 %v503, %v502
      %v511 = vpack.c.b16 %v505, %v504
      %v512 = vpack.c.b16 %v507, %v506
      %v513 = vpack.c.b16 %v509, %v508
      %vm518 = vcmask 523264
      %v520 = vsel %vm518, %v478, 0
      %v523 = vsel %vm518, %v479, 0
      %v526 = vsel %vm518, %v480, 0
      %v529 = vsel %vm518, %v481, 0
      %v532 = vsel %vm518, %v482, 0
      %v535 = vsel %vm518, %v483, 0
      %v538 = vsel %vm518, %v484, 0
      %v541 = vsel %vm518, %v485, 0
      %v544 = vsel %vm518, %v486, 0
      %v547 = vsel %vm518, %v487, 0
      %v550 = vsel %vm518, %v488, 0
      %v553 = vsel %vm518, %v489, 0
      %v556 = vsel %vm518, %v490, 0
      %v559 = vsel %vm518, %v491, 0
      %v562 = vsel %vm518, %v492, 0
      %v565 = vsel %vm518, %v493, 0
      %567 = vmatprep.subr.bf16.mxu0 0
      %568 = vmatpush1.bf16.msra.mxu0 0
      %569 = vmatprep.subr.bf16.mxu0 0
      %570 = vmatpush1.bf16.msra.mxu0 0
      %571 = vmatprep.subr.bf16.mxu0 0
      %572 = vmatpush1.bf16.msra.mxu0 0
      %573 = vmatprep.subr.bf16.mxu0 0
      %574 = vmatpush1.bf16.msra.mxu0 0
      %575 = vmatprep.subr.bf16.mxu0 0
      %576 = vmatpush1.bf16.msra.mxu0 %v513
      %577 = vmatprep.subr.bf16.mxu0 0
      %578 = vmatpush1.bf16.msra.mxu0 %v512
      %579 = vmatprep.subr.bf16.mxu0 0
      %580 = vmatpush1.bf16.msra.mxu0 %v511
      %581 = vmatprep.subr.bf16.mxu0 0
      %582 = vmatpush1.bf16.msra.mxu0 %v510
      %583 = vmatprep.subr.bf16.mxu0 0
      %584 = vmatpush2.bf16.msra.mxu0 0
      %585 = vmatprep.subr.bf16.mxu0 0
      %586 = vmatpush2.bf16.msra.mxu0 0
      %587 = vmatprep.subr.bf16.mxu0 0
      %588 = vmatpush2.bf16.msra.mxu0 0
      %589 = vmatprep.subr.bf16.mxu0 0
      %590 = vmatpush2.bf16.msra.mxu0 0
      %591 = vmatprep.subr.bf16.mxu0 0
      %592 = vmatpush2.bf16.msra.mxu0 0
      %593 = vmatprep.subr.bf16.mxu0 0
      %594 = vmatpush2.bf16.msra.mxu0 0
      %595 = vmatprep.subr.bf16.mxu0 0
      %596 = vmatpush2.bf16.msra.mxu0 0
      %597 = vmatprep.subr.bf16.mxu0 0
      %598 = vmatpush2.bf16.msra.mxu0 0
      %599 = vmatprep.mubr.bf16.mxu0 0
      %600 = vmatmul.mubr.bf16.gmra.mxu0 %v520
      %v601 = vpop.f32.mrf.mxu0
      %v602 = vadd.f32 %v413, %v601
      %v603 = vpop.f32.mrf.mxu0
      %v604 = vpop.f32.mrf.mxu0
      %v605 = vadd.f32 %v413, %v604
      %v606 = vpop.f32.mrf.mxu0
      %607 = vmatprep.mubr.bf16.mxu0 0
      %608 = vmatmul.mubr.bf16.gmra.mxu0 %v523
      %v609 = vpop.f32.mrf.mxu0
      %v610 = vadd.f32 %v413, %v609
      %v611 = vpop.f32.mrf.mxu0
      %v612 = vpop.f32.mrf.mxu0
      %v613 = vadd.f32 %v413, %v612
      %v614 = vpop.f32.mrf.mxu0
      %615 = vmatprep.mubr.bf16.mxu0 0
      %616 = vmatmul.mubr.bf16.gmra.mxu0 %v526
      %v617 = vpop.f32.mrf.mxu0
      %v618 = vadd.f32 %v413, %v617
      %v619 = vpop.f32.mrf.mxu0
      %v620 = vpop.f32.mrf.mxu0
      %v621 = vadd.f32 %v413, %v620
      %v622 = vpop.f32.mrf.mxu0
      %623 = vmatprep.mubr.bf16.mxu0 0
      %624 = vmatmul.mubr.bf16.gmra.mxu0 %v529
      %v625 = vpop.f32.mrf.mxu0
      %v626 = vadd.f32 %v413, %v625
      %v627 = vpop.f32.mrf.mxu0
      %v628 = vpop.f32.mrf.mxu0
      %v629 = vadd.f32 %v413, %v628
      %v630 = vpop.f32.mrf.mxu0
      %631 = vmatprep.mubr.bf16.mxu0 0
      %632 = vmatmul.mubr.bf16.gmra.mxu0 %v532
      %v633 = vpop.f32.mrf.mxu0
      %v634 = vadd.f32 %v413, %v633
      %v635 = vpop.f32.mrf.mxu0
      %v636 = vpop.f32.mrf.mxu0
      %v637 = vadd.f32 %v413, %v636
      %v638 = vpop.f32.mrf.mxu0
      %639 = vmatprep.mubr.bf16.mxu0 0
      %640 = vmatmul.mubr.bf16.gmra.mxu0 %v535
      %v641 = vpop.f32.mrf.mxu0
      %v642 = vadd.f32 %v413, %v641
      %v643 = vpop.f32.mrf.mxu0
      %v644 = vpop.f32.mrf.mxu0
      %v645 = vadd.f32 %v413, %v644
      %v646 = vpop.f32.mrf.mxu0
      %647 = vmatprep.mubr.bf16.mxu0 0
      %648 = vmatmul.mubr.bf16.gmra.mxu0 %v538
      %v649 = vpop.f32.mrf.mxu0
      %v650 = vadd.f32 %v413, %v649
      %v651 = vpop.f32.mrf.mxu0
      %v652 = vpop.f32.mrf.mxu0
      %v653 = vadd.f32 %v413, %v652
      %v654 = vpop.f32.mrf.mxu0
      %655 = vmatprep.mubr.bf16.mxu0 0
      %656 = vmatmul.mubr.bf16.gmra.mxu0 %v541
      %v657 = vpop.f32.mrf.mxu0
      %v658 = vadd.f32 %v413, %v657
      %v659 = vpop.f32.mrf.mxu0
      %v660 = vpop.f32.mrf.mxu0
      %v661 = vadd.f32 %v413, %v660
      %v662 = vpop.f32.mrf.mxu0
      %663 = vmatprep.mubr.bf16.mxu0 0
      %664 = vmatmul.mubr.bf16.gmra.mxu0 %v544
      %v665 = vpop.f32.mrf.mxu0
      %v666 = vadd.f32 %v413, %v665
      %v667 = vpop.f32.mrf.mxu0
      %v668 = vpop.f32.mrf.mxu0
      %v669 = vadd.f32 %v413, %v668
      %v670 = vpop.f32.mrf.mxu0
      %671 = vmatprep.mubr.bf16.mxu0 0
      %672 = vmatmul.mubr.bf16.gmra.mxu0 %v547
      %v673 = vpop.f32.mrf.mxu0
      %v674 = vadd.f32 %v413, %v673
      %v675 = vpop.f32.mrf.mxu0
      %v676 = vpop.f32.mrf.mxu0
      %v677 = vadd.f32 %v413, %v676
      %v678 = vpop.f32.mrf.mxu0
      %679 = vmatprep.mubr.bf16.mxu0 0
      %680 = vmatmul.mubr.bf16.gmra.mxu0 %v550
      %v681 = vpop.f32.mrf.mxu0
      %v682 = vadd.f32 %v413, %v681
      %v683 = vpop.f32.mrf.mxu0
      %v684 = vpop.f32.mrf.mxu0
      %v685 = vadd.f32 %v413, %v684
      %v686 = vpop.f32.mrf.mxu0
      %687 = vmatprep.mubr.bf16.mxu0 0
      %688 = vmatmul.mubr.bf16.gmra.mxu0 %v553
      %v689 = vpop.f32.mrf.mxu0
      %v690 = vadd.f32 %v413, %v689
      %v691 = vpop.f32.mrf.mxu0
      %v692 = vpop.f32.mrf.mxu0
      %v693 = vadd.f32 %v413, %v692
      %v694 = vpop.f32.mrf.mxu0
      %695 = vmatprep.mubr.bf16.mxu0 0
      %696 = vmatmul.mubr.bf16.gmra.mxu0 %v556
      %v697 = vpop.f32.mrf.mxu0
      %v698 = vadd.f32 %v413, %v697
      %v699 = vpop.f32.mrf.mxu0
      %v700 = vpop.f32.mrf.mxu0
      %v701 = vadd.f32 %v413, %v700
      %v702 = vpop.f32.mrf.mxu0
      %703 = vmatprep.mubr.bf16.mxu0 0
      %704 = vmatmul.mubr.bf16.gmra.mxu0 %v559
      %v705 = vpop.f32.mrf.mxu0
      %v706 = vadd.f32 %v413, %v705
      %v707 = vpop.f32.mrf.mxu0
      %v708 = vpop.f32.mrf.mxu0
      %v709 = vadd.f32 %v413, %v708
      %v710 = vpop.f32.mrf.mxu0
      %711 = vmatprep.mubr.bf16.mxu0 0
      %712 = vmatmul.mubr.bf16.gmra.mxu0 %v562
      %v713 = vpop.f32.mrf.mxu0
      %v714 = vadd.f32 %v413, %v713
      %v715 = vpop.f32.mrf.mxu0
      %v716 = vpop.f32.mrf.mxu0
      %v717 = vadd.f32 %v413, %v716
      %v718 = vpop.f32.mrf.mxu0
      %719 = vmatprep.mubr.bf16.mxu0 0
      %720 = vmatmul.mubr.bf16.gmra.mxu0 %v565
      %v721 = vpop.f32.mrf.mxu0
      %v722 = vadd.f32 %v413, %v721
      %v723 = vpop.f32.mrf.mxu0
      %v724 = vpop.f32.mrf.mxu0
      %v725 = vadd.f32 %v413, %v724
      %v726 = vpop.f32.mrf.mxu0
      %727 = vdwg.mxu0
      %v728 = vmax.f32 %v602, 0.0
      %v729 = vmax.f32 %v605, 0.0
      %v730 = vmax.f32 %v610, 0.0
      %v731 = vmax.f32 %v613, 0.0
      %v732 = vmax.f32 %v618, 0.0
      %v733 = vmax.f32 %v621, 0.0
      %v734 = vmax.f32 %v626, 0.0
      %v735 = vmax.f32 %v629, 0.0
      %v736 = vmax.f32 %v634, 0.0
      %v737 = vmax.f32 %v637, 0.0
      %v738 = vmax.f32 %v642, 0.0
      %v739 = vmax.f32 %v645, 0.0
      %v740 = vmax.f32 %v650, 0.0
      %v741 = vmax.f32 %v653, 0.0
      %v742 = vmax.f32 %v658, 0.0
      %v743 = vmax.f32 %v661, 0.0
      %v744 = vmax.f32 %v666, 0.0
      %v745 = vmax.f32 %v669, 0.0
      %v746 = vmax.f32 %v674, 0.0
      %v747 = vmax.f32 %v677, 0.0
      %v748 = vmax.f32 %v682, 0.0
      %v749 = vmax.f32 %v685, 0.0
      %v750 = vmax.f32 %v690, 0.0
      %v751 = vmax.f32 %v693, 0.0
      %v752 = vmax.f32 %v698, 0.0
      %v753 = vmax.f32 %v701, 0.0
      %v754 = vmax.f32 %v706, 0.0
      %v755 = vmax.f32 %v709, 0.0
      %v756 = vmax.f32 %v714, 0.0
      %v757 = vmax.f32 %v717, 0.0
      %v758 = vmax.f32 %v722, 0.0
      %v759 = vmax.f32 %v725, 0.0
      %v760 = vpack.c.bf16 %v729, %v728
      %v761 = vpack.c.bf16 %v731, %v730
      %v762 = vpack.c.bf16 %v733, %v732
      %v763 = vpack.c.bf16 %v735, %v734
      %v764 = vpack.c.bf16 %v737, %v736
      %v765 = vpack.c.bf16 %v739, %v738
      %v766 = vpack.c.bf16 %v741, %v740
      %v767 = vpack.c.bf16 %v743, %v742
      %v768 = vpack.c.bf16 %v745, %v744
      %v769 = vpack.c.bf16 %v747, %v746
      %v770 = vpack.c.bf16 %v749, %v748
      %v771 = vpack.c.bf16 %v751, %v750
      %v772 = vpack.c.bf16 %v753, %v752
      %v773 = vpack.c.bf16 %v755, %v754
      %v774 = vpack.c.bf16 %v757, %v756
      %v775 = vpack.c.bf16 %v759, %v758
      %v792 = vunpack.c.l.b16 %v760
      %v793 = vunpack.c.h.b16 %v760
      %v794 = vunpack.c.l.b16 %v761
      %v795 = vunpack.c.h.b16 %v761
      %v796 = vunpack.c.l.b16 %v762
      %v797 = vunpack.c.h.b16 %v762
      %v798 = vunpack.c.l.b16 %v763
      %v799 = vunpack.c.h.b16 %v763
      %v800 = vunpack.c.l.b16 %v764
      %v801 = vunpack.c.h.b16 %v764
      %v802 = vunpack.c.l.b16 %v765
      %v803 = vunpack.c.h.b16 %v765
      %v804 = vunpack.c.l.b16 %v766
      %v805 = vunpack.c.h.b16 %v766
      %v806 = vunpack.c.l.b16 %v767
      %v807 = vunpack.c.h.b16 %v767
      %v808 = vunpack.c.l.b16 %v768
      %v809 = vunpack.c.h.b16 %v768
      %v810 = vunpack.c.l.b16 %v769
      %v811 = vunpack.c.h.b16 %v769
      %v812 = vunpack.c.l.b16 %v770
      %v813 = vunpack.c.h.b16 %v770
      %v814 = vunpack.c.l.b16 %v771
      %v815 = vunpack.c.h.b16 %v771
      %v816 = vunpack.c.l.b16 %v772
      %v817 = vunpack.c.h.b16 %v772
      %v818 = vunpack.c.l.b16 %v773
      %v819 = vunpack.c.h.b16 %v773
      %v820 = vunpack.c.l.b16 %v774
      %v821 = vunpack.c.h.b16 %v774
      %v822 = vunpack.c.l.b16 %v775
      %v823 = vunpack.c.h.b16 %v775
      %v824 = vpack.c.b16 %v792, %v792
      %v825 = vpack.c.b16 %v793, %v793
      %v826 = vpack.c.b16 %v794, %v794
      %v827 = vpack.c.b16 %v795, %v795
      %v828 = vpack.c.b16 %v796, %v796
      %v829 = vpack.c.b16 %v797, %v797
      %v830 = vpack.c.b16 %v798, %v798
      %v831 = vpack.c.b16 %v799, %v799
      %v832 = vpack.c.b16 %v800, %v800
      %v833 = vpack.c.b16 %v801, %v801
      %v834 = vpack.c.b16 %v802, %v802
      %v835 = vpack.c.b16 %v803, %v803
      %v836 = vpack.c.b16 %v804, %v804
      %v837 = vpack.c.b16 %v805, %v805
      %v838 = vpack.c.b16 %v806, %v806
      %v839 = vpack.c.b16 %v807, %v807
      %v840 = vpack.c.b16 %v808, %v808
      %v841 = vpack.c.b16 %v809, %v809
      %v842 = vpack.c.b16 %v810, %v810
      %v843 = vpack.c.b16 %v811, %v811
      %v844 = vpack.c.b16 %v812, %v812
      %v845 = vpack.c.b16 %v813, %v813
      %v846 = vpack.c.b16 %v814, %v814
      %v847 = vpack.c.b16 %v815, %v815
      %v848 = vpack.c.b16 %v816, %v816
      %v849 = vpack.c.b16 %v817, %v817
      %v850 = vpack.c.b16 %v818, %v818
      %v851 = vpack.c.b16 %v819, %v819
      %v852 = vpack.c.b16 %v820, %v820
      %v853 = vpack.c.b16 %v821, %v821
      %v854 = vpack.c.b16 %v822, %v822
      %v855 = vpack.c.b16 %v823, %v823
      %888 = vst [vmem:[%s353] sm:$0xf] %v824
      %889 = vst [vmem:[%s353 + $0x4] sm:$0xf] %v825
      %890 = vst [vmem:[%s353 + $0x8] sm:$0xf] %v826
      %891 = vst [vmem:[%s353 + $0xc] sm:$0xf] %v827
      %892 = vst [vmem:[%s353 + $0x10] sm:$0xf] %v828
      %893 = vst [vmem:[%s353 + $0x14] sm:$0xf] %v829
      %894 = vst [vmem:[%s353 + $0x18] sm:$0xf] %v830
      %895 = vst [vmem:[%s353 + $0x1c] sm:$0xf] %v831
      %896 = vst [vmem:[%s353 + $0x20] sm:$0xf] %v832
      %897 = vst [vmem:[%s353 + $0x24] sm:$0xf] %v833
      %898 = vst [vmem:[%s353 + $0x28] sm:$0xf] %v834
      %899 = vst [vmem:[%s353 + $0x2c] sm:$0xf] %v835
      %900 = vst [vmem:[%s353 + $0x30] sm:$0xf] %v836
      %901 = vst [vmem:[%s353 + $0x34] sm:$0xf] %v837
      %902 = vst [vmem:[%s353 + $0x38] sm:$0xf] %v838
      %903 = vst [vmem:[%s353 + $0x3c] sm:$0xf] %v839
      %904 = vst [vmem:[%s353 + $0x40] sm:$0xf] %v840
      %905 = vst [vmem:[%s353 + $0x44] sm:$0xf] %v841
      %906 = vst [vmem:[%s353 + $0x48] sm:$0xf] %v842
      %907 = vst [vmem:[%s353 + $0x4c] sm:$0xf] %v843
      %908 = vst [vmem:[%s353 + $0x50] sm:$0xf] %v844
      %909 = vst [vmem:[%s353 + $0x54] sm:$0xf] %v845
      %910 = vst [vmem:[%s353 + $0x58] sm:$0xf] %v846
      %911 = vst [vmem:[%s353 + $0x5c] sm:$0xf] %v847
      %912 = vst [vmem:[%s353 + $0x60] sm:$0xf] %v848
      %913 = vst [vmem:[%s353 + $0x64] sm:$0xf] %v849
      %914 = vst [vmem:[%s353 + $0x68] sm:$0xf] %v850
      %915 = vst [vmem:[%s353 + $0x6c] sm:$0xf] %v851
      %916 = vst [vmem:[%s353 + $0x70] sm:$0xf] %v852
      %917 = vst [vmem:[%s353 + $0x74] sm:$0xf] %v853
      %918 = vst [vmem:[%s353 + $0x78] sm:$0xf] %v854
      %919 = vst [vmem:[%s353 + $0x7c] sm:$0xf] %v855
      %920 = vst [vmem:[#allocation2] sm:$0xf] %v824
      %921 = vst [vmem:[#allocation2 + $0x10] sm:$0xf] %v825
      %922 = vst [vmem:[#allocation2 + $0x20] sm:$0xf] %v826
      %923 = vst [vmem:[#allocation2 + $0x30] sm:$0xf] %v827
      %924 = vst [vmem:[#allocation2 + $0x40] sm:$0xf] %v828
      %925 = vst [vmem:[#allocation2 + $0x50] sm:$0xf] %v829
      %926 = vst [vmem:[#allocation2 + $0x60] sm:$0xf] %v830
      %927 = vst [vmem:[#allocation2 + $0x70] sm:$0xf] %v831
      %928 = vst [vmem:[#allocation2 + $0x4] sm:$0xf] %v832
      %929 = vst [vmem:[#allocation2 + $0x14] sm:$0xf] %v833
      %930 = vst [vmem:[#allocation2 + $0x24] sm:$0xf] %v834
      %931 = vst [vmem:[#allocation2 + $0x34] sm:$0xf] %v835
      %932 = vst [vmem:[#allocation2 + $0x44] sm:$0xf] %v836
      %933 = vst [vmem:[#allocation2 + $0x54] sm:$0xf] %v837
      %934 = vst [vmem:[#allocation2 + $0x64] sm:$0xf] %v838
      %935 = vst [vmem:[#allocation2 + $0x74] sm:$0xf] %v839
      %936 = vst [vmem:[#allocation2 + $0x8] sm:$0xf] %v840
      %937 = vst [vmem:[#allocation2 + $0x18] sm:$0xf] %v841
      %938 = vst [vmem:[#allocation2 + $0x28] sm:$0xf] %v842
      %939 = vst [vmem:[#allocation2 + $0x38] sm:$0xf] %v843
      %940 = vst [vmem:[#allocation2 + $0x48] sm:$0xf] %v844
      %941 = vst [vmem:[#allocation2 + $0x58] sm:$0xf] %v845
      %942 = vst [vmem:[#allocation2 + $0x68] sm:$0xf] %v846
      %943 = vst [vmem:[#allocation2 + $0x78] sm:$0xf] %v847
      %944 = vst [vmem:[#allocation2 + $0xc] sm:$0xf] %v848
      %945 = vst [vmem:[#allocation2 + $0x1c] sm:$0xf] %v849
      %946 = vst [vmem:[#allocation2 + $0x2c] sm:$0xf] %v850
      %947 = vst [vmem:[#allocation2 + $0x3c] sm:$0xf] %v851
      %948 = vst [vmem:[#allocation2 + $0x4c] sm:$0xf] %v852
      %949 = vst [vmem:[#allocation2 + $0x5c] sm:$0xf] %v853
      %950 = vst [vmem:[#allocation2 + $0x6c] sm:$0xf] %v854
      %951 = vst [vmem:[#allocation2 + $0x7c] sm:$0xf] %v855
      %v952 = vld [vmem:[#allocation2] sm:$0xff]
      %v953 = vld [vmem:[#allocation2 + $0x8] sm:$0xff]
      %v954 = vld [vmem:[#allocation2 + $0x10] sm:$0xff]
      %v955 = vld [vmem:[#allocation2 + $0x18] sm:$0xff]
      %v956 = vld [vmem:[#allocation2 + $0x20] sm:$0xff]
      %v957 = vld [vmem:[#allocation2 + $0x28] sm:$0xff]
      %v958 = vld [vmem:[#allocation2 + $0x30] sm:$0xff]
      %v959 = vld [vmem:[#allocation2 + $0x38] sm:$0xff]
      %v960 = vld [vmem:[#allocation2 + $0x40] sm:$0xff]
      %v961 = vld [vmem:[#allocation2 + $0x48] sm:$0xff]
      %v962 = vld [vmem:[#allocation2 + $0x50] sm:$0xff]
      %v963 = vld [vmem:[#allocation2 + $0x58] sm:$0xff]
      %v964 = vld [vmem:[#allocation2 + $0x60] sm:$0xff]
      %v965 = vld [vmem:[#allocation2 + $0x68] sm:$0xff]
      %v966 = vld [vmem:[#allocation2 + $0x70] sm:$0xff]
      %v967 = vld [vmem:[#allocation2 + $0x78] sm:$0xff]
      %v968 = vld [vmem:[%s2] sm:$0xf]
      %v969 = vld [vmem:[%s2 + $0x4] sm:$0xf]
      %v970 = vld [vmem:[%s2 + $0x8] sm:$0xf]
      %v971 = vld [vmem:[%s2 + $0xc] sm:$0xf]
      %v972 = vld [vmem:[%s2 + $0x10] sm:$0xf]
      %v973 = vld [vmem:[%s2 + $0x14] sm:$0xf]
      %v974 = vld [vmem:[%s2 + $0x18] sm:$0xf]
      %v975 = vld [vmem:[%s2 + $0x1c] sm:$0xf]
      %v976 = vld [vmem:[%s2 + $0x20] sm:$0xf]
      %v977 = vld [vmem:[%s2 + $0x24] sm:$0xf]
      %v978 = vld [vmem:[%s2 + $0x28] sm:$0xf]
      %v979 = vld [vmem:[%s2 + $0x2c] sm:$0xf]
      %v980 = vld [vmem:[%s2 + $0x30] sm:$0xf]
      %v981 = vld [vmem:[%s2 + $0x34] sm:$0xf]
      %v982 = vld [vmem:[%s2 + $0x38] sm:$0xf]
      %v983 = vld [vmem:[%s2 + $0x3c] sm:$0xf]
      %v984 = vld [vmem:[%s2 + $0x40] sm:$0xf]
      %v985 = vld [vmem:[%s2 + $0x44] sm:$0xf]
      %v986 = vld [vmem:[%s2 + $0x48] sm:$0xf]
      %v987 = vld [vmem:[%s2 + $0x4c] sm:$0xf]
      %v988 = vld [vmem:[%s2 + $0x50] sm:$0xf]
      %v989 = vld [vmem:[%s2 + $0x54] sm:$0xf]
      %v990 = vld [vmem:[%s2 + $0x58] sm:$0xf]
      %v991 = vld [vmem:[%s2 + $0x5c] sm:$0xf]
      %v992 = vld [vmem:[%s2 + $0x60] sm:$0xf]
      %v993 = vld [vmem:[%s2 + $0x64] sm:$0xf]
      %v994 = vld [vmem:[%s2 + $0x68] sm:$0xf]
      %v995 = vld [vmem:[%s2 + $0x6c] sm:$0xf]
      %v996 = vld [vmem:[%s2 + $0x70] sm:$0xf]
      %v997 = vld [vmem:[%s2 + $0x74] sm:$0xf]
      %v998 = vld [vmem:[%s2 + $0x78] sm:$0xf]
      %v999 = vld [vmem:[%s2 + $0x7c] sm:$0xf]
      %v1000 = vld [vmem:[%s2 + $0x80] sm:$0xf]
      %v1001 = vld [vmem:[%s2 + $0x84] sm:$0xf]
      %v1002 = vld [vmem:[%s2 + $0x88] sm:$0xf]
      %v1003 = vld [vmem:[%s2 + $0x8c] sm:$0xf]
      %v1004 = vld [vmem:[%s2 + $0x90] sm:$0xf]
      %v1005 = vld [vmem:[%s2 + $0x94] sm:$0xf]
      %v1006 = vld [vmem:[%s2 + $0x98] sm:$0xf]
      %v1007 = vld [vmem:[%s2 + $0x9c] sm:$0xf]
      %v1008 = vld [vmem:[%s2 + $0xa0] sm:$0xf]
      %v1009 = vld [vmem:[%s2 + $0xa4] sm:$0xf]
      %v1010 = vld [vmem:[%s2 + $0xa8] sm:$0xf]
      %v1011 = vld [vmem:[%s2 + $0xac] sm:$0xf]
      %v1012 = vld [vmem:[%s2 + $0xb0] sm:$0xf]
      %v1013 = vld [vmem:[%s2 + $0xb4] sm:$0xf]
      %v1014 = vld [vmem:[%s2 + $0xb8] sm:$0xf]
      %v1015 = vld [vmem:[%s2 + $0xbc] sm:$0xf]
      %v1016 = vld [vmem:[%s2 + $0xc0] sm:$0xf]
      %v1017 = vld [vmem:[%s2 + $0xc4] sm:$0xf]
      %v1018 = vld [vmem:[%s2 + $0xc8] sm:$0xf]
      %v1019 = vld [vmem:[%s2 + $0xcc] sm:$0xf]
      %v1020 = vld [vmem:[%s2 + $0xd0] sm:$0xf]
      %v1021 = vld [vmem:[%s2 + $0xd4] sm:$0xf]
      %v1022 = vld [vmem:[%s2 + $0xd8] sm:$0xf]
      %v1023 = vld [vmem:[%s2 + $0xdc] sm:$0xf]
      %v1024 = vld [vmem:[%s2 + $0xe0] sm:$0xf]
      %v1025 = vld [vmem:[%s2 + $0xe4] sm:$0xf]
      %v1026 = vld [vmem:[%s2 + $0xe8] sm:$0xf]
      %v1027 = vld [vmem:[%s2 + $0xec] sm:$0xf]
      %v1028 = vld [vmem:[%s2 + $0xf0] sm:$0xf]
      %v1029 = vld [vmem:[%s2 + $0xf4] sm:$0xf]
      %v1030 = vld [vmem:[%s2 + $0xf8] sm:$0xf]
      %v1031 = vld [vmem:[%s2 + $0xfc] sm:$0xf]
      %v1032 = vld [vmem:[%s5 + $0x1] sm:$0x1]
      %v1033 = vlaneseq
      %v1034 = vshrl.u32 %v1033, 7
      %v1035 = vsub.s32 0, %v1034
      %v1036 = vrot.slane %v1032, %v1035
      %v1053 = vunpack.c.l.b16 %v952
      %v1054 = vunpack.c.h.b16 %v952
      %v1055 = vunpack.c.l.b16 %v953
      %v1056 = vunpack.c.h.b16 %v953
      %v1057 = vunpack.c.l.b16 %v954
      %v1058 = vunpack.c.h.b16 %v954
      %v1059 = vunpack.c.l.b16 %v955
      %v1060 = vunpack.c.h.b16 %v955
      %v1061 = vunpack.c.l.b16 %v956
      %v1062 = vunpack.c.h.b16 %v956
      %v1063 = vunpack.c.l.b16 %v957
      %v1064 = vunpack.c.h.b16 %v957
      %v1065 = vunpack.c.l.b16 %v958
      %v1066 = vunpack.c.h.b16 %v958
      %v1067 = vunpack.c.l.b16 %v959
      %v1068 = vunpack.c.h.b16 %v959
      %v1069 = vunpack.c.l.b16 %v960
      %v1070 = vunpack.c.h.b16 %v960
      %v1071 = vunpack.c.l.b16 %v961
      %v1072 = vunpack.c.h.b16 %v961
      %v1073 = vunpack.c.l.b16 %v962
      %v1074 = vunpack.c.h.b16 %v962
      %v1075 = vunpack.c.l.b16 %v963
      %v1076 = vunpack.c.h.b16 %v963
      %v1077 = vunpack.c.l.b16 %v964
      %v1078 = vunpack.c.h.b16 %v964
      %v1079 = vunpack.c.l.b16 %v965
      %v1080 = vunpack.c.h.b16 %v965
      %v1081 = vunpack.c.l.b16 %v966
      %v1082 = vunpack.c.h.b16 %v966
      %v1083 = vunpack.c.l.b16 %v967
      %v1084 = vunpack.c.h.b16 %v967
      %v1085 = vpack.c.b16 %v1057, %v1053
      %v1086 = vpack.c.b16 %v1058, %v1054
      %v1087 = vpack.c.b16 %v1059, %v1055
      %v1088 = vpack.c.b16 %v1060, %v1056
      %v1089 = vpack.c.b16 %v1065, %v1061
      %v1090 = vpack.c.b16 %v1066, %v1062
      %v1091 = vpack.c.b16 %v1067, %v1063
      %v1092 = vpack.c.b16 %v1068, %v1064
      %v1093 = vpack.c.b16 %v1073, %v1069
      %v1094 = vpack.c.b16 %v1074, %v1070
      %v1095 = vpack.c.b16 %v1075, %v1071
      %v1096 = vpack.c.b16 %v1076, %v1072
      %v1097 = vpack.c.b16 %v1081, %v1077
      %v1098 = vpack.c.b16 %v1082, %v1078
      %v1099 = vpack.c.b16 %v1083, %v1079
      %v1100 = vpack.c.b16 %v1084, %v1080
      %v1181 = vunpack.c.l.b16 %v968
      %v1182 = vunpack.c.l.b16 %v969
      %v1183 = vunpack.c.l.b16 %v970
      %v1184 = vunpack.c.l.b16 %v971
      %v1185 = vunpack.c.l.b16 %v972
      %v1186 = vunpack.c.l.b16 %v973
      %v1187 = vunpack.c.l.b16 %v974
      %v1188 = vunpack.c.l.b16 %v975
      %v1189 = vunpack.c.l.b16 %v976
      %v1190 = vunpack.c.l.b16 %v977
      %v1191 = vunpack.c.l.b16 %v978
      %v1192 = vunpack.c.l.b16 %v979
      %v1193 = vunpack.c.l.b16 %v980
      %v1194 = vunpack.c.l.b16 %v981
      %v1195 = vunpack.c.l.b16 %v982
      %v1196 = vunpack.c.l.b16 %v983
      %v1197 = vunpack.c.l.b16 %v984
      %v1198 = vunpack.c.l.b16 %v985
      %v1199 = vunpack.c.l.b16 %v986
      %v1200 = vunpack.c.l.b16 %v987
      %v1201 = vunpack.c.l.b16 %v988
      %v1202 = vunpack.c.l.b16 %v989
      %v1203 = vunpack.c.l.b16 %v990
      %v1204 = vunpack.c.l.b16 %v991
      %v1205 = vunpack.c.l.b16 %v992
      %v1206 = vunpack.c.l.b16 %v993
      %v1207 = vunpack.c.l.b16 %v994
      %v1208 = vunpack.c.l.b16 %v995
      %v1209 = vunpack.c.l.b16 %v996
      %v1210 = vunpack.c.l.b16 %v997
      %v1211 = vunpack.c.l.b16 %v998
      %v1212 = vunpack.c.l.b16 %v999
      %v1213 = vunpack.c.l.b16 %v1000
      %v1214 = vunpack.c.l.b16 %v1001
      %v1215 = vunpack.c.l.b16 %v1002
      %v1216 = vunpack.c.l.b16 %v1003
      %v1217 = vunpack.c.l.b16 %v1004
      %v1218 = vunpack.c.l.b16 %v1005
      %v1219 = vunpack.c.l.b16 %v1006
      %v1220 = vunpack.c.l.b16 %v1007
      %v1221 = vunpack.c.l.b16 %v1008
      %v1222 = vunpack.c.l.b16 %v1009
      %v1223 = vunpack.c.l.b16 %v1010
      %v1224 = vunpack.c.l.b16 %v1011
      %v1225 = vunpack.c.l.b16 %v1012
      %v1226 = vunpack.c.l.b16 %v1013
      %v1227 = vunpack.c.l.b16 %v1014
      %v1228 = vunpack.c.l.b16 %v1015
      %v1229 = vunpack.c.l.b16 %v1016
      %v1230 = vunpack.c.l.b16 %v1017
      %v1231 = vunpack.c.l.b16 %v1018
      %v1232 = vunpack.c.l.b16 %v1019
      %v1233 = vunpack.c.l.b16 %v1020
      %v1234 = vunpack.c.l.b16 %v1021
      %v1235 = vunpack.c.l.b16 %v1022
      %v1236 = vunpack.c.l.b16 %v1023
      %v1237 = vunpack.c.l.b16 %v1024
      %v1238 = vunpack.c.l.b16 %v1025
      %v1239 = vunpack.c.l.b16 %v1026
      %v1240 = vunpack.c.l.b16 %v1027
      %v1241 = vunpack.c.l.b16 %v1028
      %v1242 = vunpack.c.l.b16 %v1029
      %v1243 = vunpack.c.l.b16 %v1030
      %v1244 = vunpack.c.l.b16 %v1031
      %v1245 = vpack.c.b16 %v1182, %v1181
      %v1246 = vpack.c.b16 %v1184, %v1183
      %v1247 = vpack.c.b16 %v1186, %v1185
      %v1248 = vpack.c.b16 %v1188, %v1187
      %v1249 = vpack.c.b16 %v1190, %v1189
      %v1250 = vpack.c.b16 %v1192, %v1191
      %v1251 = vpack.c.b16 %v1194, %v1193
      %v1252 = vpack.c.b16 %v1196, %v1195
      %v1253 = vpack.c.b16 %v1198, %v1197
      %v1254 = vpack.c.b16 %v1200, %v1199
      %v1255 = vpack.c.b16 %v1202, %v1201
      %v1256 = vpack.c.b16 %v1204, %v1203
      %v1257 = vpack.c.b16 %v1206, %v1205
      %v1258 = vpack.c.b16 %v1208, %v1207
      %v1259 = vpack.c.b16 %v1210, %v1209
      %v1260 = vpack.c.b16 %v1212, %v1211
      %v1261 = vpack.c.b16 %v1214, %v1213
      %v1262 = vpack.c.b16 %v1216, %v1215
      %v1263 = vpack.c.b16 %v1218, %v1217
      %v1264 = vpack.c.b16 %v1220, %v1219
      %v1265 = vpack.c.b16 %v1222, %v1221
      %v1266 = vpack.c.b16 %v1224, %v1223
      %v1267 = vpack.c.b16 %v1226, %v1225
      %v1268 = vpack.c.b16 %v1228, %v1227
      %v1269 = vpack.c.b16 %v1230, %v1229
      %v1270 = vpack.c.b16 %v1232, %v1231
      %v1271 = vpack.c.b16 %v1234, %v1233
      %v1272 = vpack.c.b16 %v1236, %v1235
      %v1273 = vpack.c.b16 %v1238, %v1237
      %v1274 = vpack.c.b16 %v1240, %v1239
      %v1275 = vpack.c.b16 %v1242, %v1241
      %v1276 = vpack.c.b16 %v1244, %v1243
      %1309 = vmatprep.subr.bf16.mxu0 0
      %1310 = vmatpush1.bf16.msra.mxu0 %v1252
      %1311 = vmatprep.subr.bf16.mxu0 0
      %1312 = vmatpush1.bf16.msra.mxu0 %v1251
      %1313 = vmatprep.subr.bf16.mxu0 0
      %1314 = vmatpush1.bf16.msra.mxu0 %v1250
      %1315 = vmatprep.subr.bf16.mxu0 0
      %1316 = vmatpush1.bf16.msra.mxu0 %v1249
      %1317 = vmatprep.subr.bf16.mxu0 0
      %1318 = vmatpush1.bf16.msra.mxu0 %v1248
      %1319 = vmatprep.subr.bf16.mxu0 0
      %1320 = vmatpush1.bf16.msra.mxu0 %v1247
      %1321 = vmatprep.subr.bf16.mxu0 0
      %1322 = vmatpush1.bf16.msra.mxu0 %v1246
      %1323 = vmatprep.subr.bf16.mxu0 0
      %1324 = vmatpush1.bf16.msra.mxu0 %v1245
      %1325 = vmatprep.subr.bf16.mxu0 0
      %1326 = vmatpush2.bf16.msra.mxu0 %v1260
      %1327 = vmatprep.subr.bf16.mxu0 0
      %1328 = vmatpush2.bf16.msra.mxu0 %v1259
      %1329 = vmatprep.subr.bf16.mxu0 0
      %1330 = vmatpush2.bf16.msra.mxu0 %v1258
      %1331 = vmatprep.subr.bf16.mxu0 0
      %1332 = vmatpush2.bf16.msra.mxu0 %v1257
      %1333 = vmatprep.subr.bf16.mxu0 0
      %1334 = vmatpush2.bf16.msra.mxu0 %v1256
      %1335 = vmatprep.subr.bf16.mxu0 0
      %1336 = vmatpush2.bf16.msra.mxu0 %v1255
      %1337 = vmatprep.subr.bf16.mxu0 0
      %1338 = vmatpush2.bf16.msra.mxu0 %v1254
      %1339 = vmatprep.subr.bf16.mxu0 0
      %1340 = vmatpush2.bf16.msra.mxu0 %v1253
      %1341 = vmatprep.mubr.bf16.mxu0 %v1086
      %1342 = vmatmul.mubr.bf16.gmra.mxu0 %v1085
      %v1343 = vpop.f32.mrf.mxu0
      %v1344 = vadd.f32 %v1036, %v1343
      %v1345 = vpop.f32.mrf.mxu0
      %v1346 = vpop.f32.mrf.mxu0
      %v1347 = vadd.f32 %v1036, %v1346
      %v1348 = vpop.f32.mrf.mxu0
      %1349 = vmatprep.mubr.bf16.mxu0 %v1090
      %1350 = vmatmul.mubr.bf16.gmra.mxu0 %v1089
      %v1351 = vpop.f32.mrf.mxu0
      %v1352 = vadd.f32 %v1036, %v1351
      %v1353 = vpop.f32.mrf.mxu0
      %v1354 = vpop.f32.mrf.mxu0
      %v1355 = vadd.f32 %v1036, %v1354
      %v1356 = vpop.f32.mrf.mxu0
      %1357 = vmatprep.mubr.bf16.mxu0 %v1094
      %1358 = vmatmul.mubr.bf16.gmra.mxu0 %v1093
      %v1359 = vpop.f32.mrf.mxu0
      %v1360 = vadd.f32 %v1036, %v1359
      %v1361 = vpop.f32.mrf.mxu0
      %v1362 = vpop.f32.mrf.mxu0
      %v1363 = vadd.f32 %v1036, %v1362
      %v1364 = vpop.f32.mrf.mxu0
      %1365 = vmatprep.mubr.bf16.mxu0 %v1098
      %1366 = vmatmul.mubr.bf16.gmra.mxu0 %v1097
      %v1367 = vpop.f32.mrf.mxu0
      %v1368 = vadd.f32 %v1036, %v1367
      %v1369 = vpop.f32.mrf.mxu0
      %v1370 = vpop.f32.mrf.mxu0
      %v1371 = vadd.f32 %v1036, %v1370
      %v1372 = vpop.f32.mrf.mxu0
      %1373 = vdwg.mxu0
      %1374 = vmatprep.subr.bf16.mxu0 0
      %1375 = vmatpush1.bf16.msra.mxu0 %v1268
      %1376 = vmatprep.subr.bf16.mxu0 0
      %1377 = vmatpush1.bf16.msra.mxu0 %v1267
      %1378 = vmatprep.subr.bf16.mxu0 0
      %1379 = vmatpush1.bf16.msra.mxu0 %v1266
      %1380 = vmatprep.subr.bf16.mxu0 0
      %1381 = vmatpush1.bf16.msra.mxu0 %v1265
      %1382 = vmatprep.subr.bf16.mxu0 0
      %1383 = vmatpush1.bf16.msra.mxu0 %v1264
      %1384 = vmatprep.subr.bf16.mxu0 0
      %1385 = vmatpush1.bf16.msra.mxu0 %v1263
      %1386 = vmatprep.subr.bf16.mxu0 0
      %1387 = vmatpush1.bf16.msra.mxu0 %v1262
      %1388 = vmatprep.subr.bf16.mxu0 0
      %1389 = vmatpush1.bf16.msra.mxu0 %v1261
      %1390 = vmatprep.subr.bf16.mxu0 0
      %1391 = vmatpush2.bf16.msra.mxu0 %v1276
      %1392 = vmatprep.subr.bf16.mxu0 0
      %1393 = vmatpush2.bf16.msra.mxu0 %v1275
      %1394 = vmatprep.subr.bf16.mxu0 0
      %1395 = vmatpush2.bf16.msra.mxu0 %v1274
      %1396 = vmatprep.subr.bf16.mxu0 0
      %1397 = vmatpush2.bf16.msra.mxu0 %v1273
      %1398 = vmatprep.subr.bf16.mxu0 0
      %1399 = vmatpush2.bf16.msra.mxu0 %v1272
      %1400 = vmatprep.subr.bf16.mxu0 0
      %1401 = vmatpush2.bf16.msra.mxu0 %v1271
      %1402 = vmatprep.subr.bf16.mxu0 0
      %1403 = vmatpush2.bf16.msra.mxu0 %v1270
      %1404 = vmatprep.subr.bf16.mxu0 0
      %1405 = vmatpush2.bf16.msra.mxu0 %v1269
      %1406 = vmatprep.mubr.bf16.mxu0 %v1088
      %1407 = vmatmul.mubr.bf16.gmra.mxu0 %v1087
      %v1408 = vpop.f32.mrf.mxu0
      %v1409 = vadd.f32 %v1344, %v1408
      %v1410 = vpop.f32.mrf.mxu0
      %v1411 = vpop.f32.mrf.mxu0
      %v1412 = vadd.f32 %v1347, %v1411
      %v1413 = vpop.f32.mrf.mxu0
      %1414 = vmatprep.mubr.bf16.mxu0 %v1092
      %1415 = vmatmul.mubr.bf16.gmra.mxu0 %v1091
      %v1416 = vpop.f32.mrf.mxu0
      %v1417 = vadd.f32 %v1352, %v1416
      %v1418 = vpop.f32.mrf.mxu0
      %v1419 = vpop.f32.mrf.mxu0
      %v1420 = vadd.f32 %v1355, %v1419
      %v1421 = vpop.f32.mrf.mxu0
      %1422 = vmatprep.mubr.bf16.mxu0 %v1096
      %1423 = vmatmul.mubr.bf16.gmra.mxu0 %v1095
      %v1424 = vpop.f32.mrf.mxu0
      %v1425 = vadd.f32 %v1360, %v1424
      %v1426 = vpop.f32.mrf.mxu0
      %v1427 = vpop.f32.mrf.mxu0
      %v1428 = vadd.f32 %v1363, %v1427
      %v1429 = vpop.f32.mrf.mxu0
      %1430 = vmatprep.mubr.bf16.mxu0 %v1100
      %1431 = vmatmul.mubr.bf16.gmra.mxu0 %v1099
      %v1432 = vpop.f32.mrf.mxu0
      %v1433 = vadd.f32 %v1368, %v1432
      %v1434 = vpop.f32.mrf.mxu0
      %v1435 = vpop.f32.mrf.mxu0
      %v1436 = vadd.f32 %v1371, %v1435
      %v1437 = vpop.f32.mrf.mxu0
      %1438 = vdwg.mxu0
      %v1439 = vmax.f32 %v1409, 0.0
      %v1440 = vmax.f32 %v1412, 0.0
      %v1441 = vmax.f32 %v1417, 0.0
      %v1442 = vmax.f32 %v1420, 0.0
      %v1443 = vmax.f32 %v1425, 0.0
      %v1444 = vmax.f32 %v1428, 0.0
      %v1445 = vmax.f32 %v1433, 0.0
      %v1446 = vmax.f32 %v1436, 0.0
      %v1447 = vpack.c.bf16 %v1440, %v1439
      %v1448 = vpack.c.bf16 %v1442, %v1441
      %v1449 = vpack.c.bf16 %v1444, %v1443
      %v1450 = vpack.c.bf16 %v1446, %v1445
      %v1455 = vunpack.c.l.b16 %v1447
      %v1456 = vunpack.c.h.b16 %v1447
      %v1457 = vunpack.c.l.b16 %v1448
      %v1458 = vunpack.c.h.b16 %v1448
      %v1459 = vunpack.c.l.b16 %v1449
      %v1460 = vunpack.c.h.b16 %v1449
      %v1461 = vunpack.c.l.b16 %v1450
      %v1462 = vunpack.c.h.b16 %v1450
      %v1463 = vpack.c.b16 %v1455, %v1455
      %v1464 = vpack.c.b16 %v1456, %v1456
      %v1465 = vpack.c.b16 %v1457, %v1457
      %v1466 = vpack.c.b16 %v1458, %v1458
      %v1467 = vpack.c.b16 %v1459, %v1459
      %v1468 = vpack.c.b16 %v1460, %v1460
      %v1469 = vpack.c.b16 %v1461, %v1461
      %v1470 = vpack.c.b16 %v1462, %v1462
      %1479 = vst [vmem:[%s358] sm:$0xf] %v1463
      %1480 = vst [vmem:[%s358 + $0x4] sm:$0xf] %v1464
      %1481 = vst [vmem:[%s358 + $0x8] sm:$0xf] %v1465
      %1482 = vst [vmem:[%s358 + $0xc] sm:$0xf] %v1466
      %1483 = vst [vmem:[%s358 + $0x10] sm:$0xf] %v1467
      %1484 = vst [vmem:[%s358 + $0x14] sm:$0xf] %v1468
      %1485 = vst [vmem:[%s358 + $0x18] sm:$0xf] %v1469
      %1486 = vst [vmem:[%s358 + $0x1c] sm:$0xf] %v1470
      %1487 = vst [vmem:[#allocation3] sm:$0xf] %v1463
      %1488 = vst [vmem:[#allocation3 + $0x10] sm:$0xf] %v1464
      %1489 = vst [vmem:[#allocation3 + $0x4] sm:$0xf] %v1465
      %1490 = vst [vmem:[#allocation3 + $0x14] sm:$0xf] %v1466
      %1491 = vst [vmem:[#allocation3 + $0x8] sm:$0xf] %v1467
      %1492 = vst [vmem:[#allocation3 + $0x18] sm:$0xf] %v1468
      %1493 = vst [vmem:[#allocation3 + $0xc] sm:$0xf] %v1469
      %1494 = vst [vmem:[#allocation3 + $0x1c] sm:$0xf] %v1470
      %v1495 = vld [vmem:[#allocation3] sm:$0xff]
      %v1496 = vld [vmem:[#allocation3 + $0x8] sm:$0xff]
      %v1497 = vld [vmem:[#allocation3 + $0x10] sm:$0xff]
      %v1498 = vld [vmem:[#allocation3 + $0x18] sm:$0xff]
      %v1499 = vld [vmem:[%s3] sm:$0xf]
      %v1500 = vld [vmem:[%s3 + $0x4] sm:$0xf]
      %v1501 = vld [vmem:[%s3 + $0x8] sm:$0xf]
      %v1502 = vld [vmem:[%s3 + $0xc] sm:$0xf]
      %v1503 = vld [vmem:[%s3 + $0x10] sm:$0xf]
      %v1504 = vld [vmem:[%s3 + $0x14] sm:$0xf]
      %v1505 = vld [vmem:[%s3 + $0x18] sm:$0xf]
      %v1506 = vld [vmem:[%s3 + $0x1c] sm:$0xf]
      %v1507 = vld [vmem:[%s3 + $0x20] sm:$0xf]
      %v1508 = vld [vmem:[%s3 + $0x24] sm:$0xf]
      %v1509 = vld [vmem:[%s3 + $0x28] sm:$0xf]
      %v1510 = vld [vmem:[%s3 + $0x2c] sm:$0xf]
      %v1511 = vld [vmem:[%s3 + $0x30] sm:$0xf]
      %v1512 = vld [vmem:[%s3 + $0x34] sm:$0xf]
      %v1513 = vld [vmem:[%s3 + $0x38] sm:$0xf]
      %v1514 = vld [vmem:[%s3 + $0x3c] sm:$0xf]
      %v1515 = vld [vmem:[%s3 + $0x40] sm:$0xf]
      %v1516 = vld [vmem:[%s3 + $0x44] sm:$0xf]
      %v1517 = vld [vmem:[%s3 + $0x48] sm:$0xf]
      %v1518 = vld [vmem:[%s3 + $0x4c] sm:$0xf]
      %v1519 = vld [vmem:[%s3 + $0x50] sm:$0xf]
      %v1520 = vld [vmem:[%s3 + $0x54] sm:$0xf]
      %v1521 = vld [vmem:[%s3 + $0x58] sm:$0xf]
      %v1522 = vld [vmem:[%s3 + $0x5c] sm:$0xf]
      %v1523 = vld [vmem:[%s3 + $0x60] sm:$0xf]
      %v1524 = vld [vmem:[%s3 + $0x64] sm:$0xf]
      %v1525 = vld [vmem:[%s3 + $0x68] sm:$0xf]
      %v1526 = vld [vmem:[%s3 + $0x6c] sm:$0xf]
      %v1527 = vld [vmem:[%s3 + $0x70] sm:$0xf]
      %v1528 = vld [vmem:[%s3 + $0x74] sm:$0xf]
      %v1529 = vld [vmem:[%s3 + $0x78] sm:$0xf]
      %v1530 = vld [vmem:[%s3 + $0x7c] sm:$0xf]
      %v1531 = vld [vmem:[%s3 + $0x80] sm:$0xf]
      %v1532 = vld [vmem:[%s3 + $0x84] sm:$0xf]
      %v1533 = vld [vmem:[%s3 + $0x88] sm:$0xf]
      %v1534 = vld [vmem:[%s3 + $0x8c] sm:$0xf]
      %v1535 = vld [vmem:[%s3 + $0x90] sm:$0xf]
      %v1536 = vld [vmem:[%s3 + $0x94] sm:$0xf]
      %v1537 = vld [vmem:[%s3 + $0x98] sm:$0xf]
      %v1538 = vld [vmem:[%s3 + $0x9c] sm:$0xf]
      %v1539 = vld [vmem:[%s3 + $0xa0] sm:$0xf]
      %v1540 = vld [vmem:[%s3 + $0xa4] sm:$0xf]
      %v1541 = vld [vmem:[%s3 + $0xa8] sm:$0xf]
      %v1542 = vld [vmem:[%s3 + $0xac] sm:$0xf]
      %v1543 = vld [vmem:[%s3 + $0xb0] sm:$0xf]
      %v1544 = vld [vmem:[%s3 + $0xb4] sm:$0xf]
      %v1545 = vld [vmem:[%s3 + $0xb8] sm:$0xf]
      %v1546 = vld [vmem:[%s3 + $0xbc] sm:$0xf]
      %v1547 = vld [vmem:[%s3 + $0xc0] sm:$0xf]
      %v1548 = vld [vmem:[%s3 + $0xc4] sm:$0xf]
      %v1549 = vld [vmem:[%s3 + $0xc8] sm:$0xf]
      %v1550 = vld [vmem:[%s3 + $0xcc] sm:$0xf]
      %v1551 = vld [vmem:[%s3 + $0xd0] sm:$0xf]
      %v1552 = vld [vmem:[%s3 + $0xd4] sm:$0xf]
      %v1553 = vld [vmem:[%s3 + $0xd8] sm:$0xf]
      %v1554 = vld [vmem:[%s3 + $0xdc] sm:$0xf]
      %v1555 = vld [vmem:[%s3 + $0xe0] sm:$0xf]
      %v1556 = vld [vmem:[%s3 + $0xe4] sm:$0xf]
      %v1557 = vld [vmem:[%s3 + $0xe8] sm:$0xf]
      %v1558 = vld [vmem:[%s3 + $0xec] sm:$0xf]
      %v1559 = vld [vmem:[%s3 + $0xf0] sm:$0xf]
      %v1560 = vld [vmem:[%s3 + $0xf4] sm:$0xf]
      %v1561 = vld [vmem:[%s3 + $0xf8] sm:$0xf]
      %v1562 = vld [vmem:[%s3 + $0xfc] sm:$0xf]
      %v1563 = vld [vmem:[%s5 + $0x2] sm:$0x1]
      %v1564 = vlaneseq
      %v1565 = vshrl.u32 %v1564, 7
      %v1566 = vsub.s32 0, %v1565
      %v1567 = vrot.slane %v1563, %v1566
      %v1572 = vunpack.c.l.b16 %v1495
      %v1573 = vunpack.c.h.b16 %v1495
      %v1574 = vunpack.c.l.b16 %v1496
      %v1575 = vunpack.c.h.b16 %v1496
      %v1576 = vunpack.c.l.b16 %v1497
      %v1577 = vunpack.c.h.b16 %v1497
      %v1578 = vunpack.c.l.b16 %v1498
      %v1579 = vunpack.c.h.b16 %v1498
      %v1580 = vpack.c.b16 %v1576, %v1572
      %v1581 = vpack.c.b16 %v1577, %v1573
      %v1582 = vpack.c.b16 %v1578, %v1574
      %v1583 = vpack.c.b16 %v1579, %v1575
      %v1652 = vunpack.c.l.b16 %v1499
      %v1653 = vunpack.c.l.b16 %v1500
      %v1654 = vunpack.c.l.b16 %v1501
      %v1655 = vunpack.c.l.b16 %v1502
      %v1656 = vunpack.c.l.b16 %v1503
      %v1657 = vunpack.c.l.b16 %v1504
      %v1658 = vunpack.c.l.b16 %v1505
      %v1659 = vunpack.c.l.b16 %v1506
      %v1660 = vunpack.c.l.b16 %v1507
      %v1661 = vunpack.c.l.b16 %v1508
      %v1662 = vunpack.c.l.b16 %v1509
      %v1663 = vunpack.c.l.b16 %v1510
      %v1664 = vunpack.c.l.b16 %v1511
      %v1665 = vunpack.c.l.b16 %v1512
      %v1666 = vunpack.c.l.b16 %v1513
      %v1667 = vunpack.c.l.b16 %v1514
      %v1668 = vunpack.c.l.b16 %v1515
      %v1669 = vunpack.c.l.b16 %v1516
      %v1670 = vunpack.c.l.b16 %v1517
      %v1671 = vunpack.c.l.b16 %v1518
      %v1672 = vunpack.c.l.b16 %v1519
      %v1673 = vunpack.c.l.b16 %v1520
      %v1674 = vunpack.c.l.b16 %v1521
      %v1675 = vunpack.c.l.b16 %v1522
      %v1676 = vunpack.c.l.b16 %v1523
      %v1677 = vunpack.c.l.b16 %v1524
      %v1678 = vunpack.c.l.b16 %v1525
      %v1679 = vunpack.c.l.b16 %v1526
      %v1680 = vunpack.c.l.b16 %v1527
      %v1681 = vunpack.c.l.b16 %v1528
      %v1682 = vunpack.c.l.b16 %v1529
      %v1683 = vunpack.c.l.b16 %v1530
      %v1684 = vunpack.c.l.b16 %v1531
      %v1685 = vunpack.c.l.b16 %v1532
      %v1686 = vunpack.c.l.b16 %v1533
      %v1687 = vunpack.c.l.b16 %v1534
      %v1688 = vunpack.c.l.b16 %v1535
      %v1689 = vunpack.c.l.b16 %v1536
      %v1690 = vunpack.c.l.b16 %v1537
      %v1691 = vunpack.c.l.b16 %v1538
      %v1692 = vunpack.c.l.b16 %v1539
      %v1693 = vunpack.c.l.b16 %v1540
      %v1694 = vunpack.c.l.b16 %v1541
      %v1695 = vunpack.c.l.b16 %v1542
      %v1696 = vunpack.c.l.b16 %v1543
      %v1697 = vunpack.c.l.b16 %v1544
      %v1698 = vunpack.c.l.b16 %v1545
      %v1699 = vunpack.c.l.b16 %v1546
      %v1700 = vunpack.c.l.b16 %v1547
      %v1701 = vunpack.c.l.b16 %v1548
      %v1702 = vunpack.c.l.b16 %v1549
      %v1703 = vunpack.c.l.b16 %v1550
      %v1704 = vunpack.c.l.b16 %v1551
      %v1705 = vunpack.c.l.b16 %v1552
      %v1706 = vunpack.c.l.b16 %v1553
      %v1707 = vunpack.c.l.b16 %v1554
      %v1708 = vunpack.c.l.b16 %v1555
      %v1709 = vunpack.c.l.b16 %v1556
      %v1710 = vunpack.c.l.b16 %v1557
      %v1711 = vunpack.c.l.b16 %v1558
      %v1712 = vunpack.c.l.b16 %v1559
      %v1713 = vunpack.c.l.b16 %v1560
      %v1714 = vunpack.c.l.b16 %v1561
      %v1715 = vunpack.c.l.b16 %v1562
      %v1716 = vpack.c.b16 %v1653, %v1652
      %v1717 = vpack.c.b16 %v1655, %v1654
      %v1718 = vpack.c.b16 %v1657, %v1656
      %v1719 = vpack.c.b16 %v1659, %v1658
      %v1720 = vpack.c.b16 %v1661, %v1660
      %v1721 = vpack.c.b16 %v1663, %v1662
      %v1722 = vpack.c.b16 %v1665, %v1664
      %v1723 = vpack.c.b16 %v1667, %v1666
      %v1724 = vpack.c.b16 %v1669, %v1668
      %v1725 = vpack.c.b16 %v1671, %v1670
      %v1726 = vpack.c.b16 %v1673, %v1672
      %v1727 = vpack.c.b16 %v1675, %v1674
      %v1728 = vpack.c.b16 %v1677, %v1676
      %v1729 = vpack.c.b16 %v1679, %v1678
      %v1730 = vpack.c.b16 %v1681, %v1680
      %v1731 = vpack.c.b16 %v1683, %v1682
      %v1732 = vpack.c.b16 %v1685, %v1684
      %v1733 = vpack.c.b16 %v1687, %v1686
      %v1734 = vpack.c.b16 %v1689, %v1688
      %v1735 = vpack.c.b16 %v1691, %v1690
      %v1736 = vpack.c.b16 %v1693, %v1692
      %v1737 = vpack.c.b16 %v1695, %v1694
      %v1738 = vpack.c.b16 %v1697, %v1696
      %v1739 = vpack.c.b16 %v1699, %v1698
      %v1740 = vpack.c.b16 %v1701, %v1700
      %v1741 = vpack.c.b16 %v1703, %v1702
      %v1742 = vpack.c.b16 %v1705, %v1704
      %v1743 = vpack.c.b16 %v1707, %v1706
      %v1744 = vpack.c.b16 %v1709, %v1708
      %v1745 = vpack.c.b16 %v1711, %v1710
      %v1746 = vpack.c.b16 %v1713, %v1712
      %v1747 = vpack.c.b16 %v1715, %v1714
      %1780 = vmatprep.subr.bf16.mxu0 0
      %1781 = vmatpush1.bf16.msra.mxu0 %v1723
      %1782 = vmatprep.subr.bf16.mxu0 0
      %1783 = vmatpush1.bf16.msra.mxu0 %v1722
      %1784 = vmatprep.subr.bf16.mxu0 0
      %1785 = vmatpush1.bf16.msra.mxu0 %v1721
      %1786 = vmatprep.subr.bf16.mxu0 0
      %1787 = vmatpush1.bf16.msra.mxu0 %v1720
      %1788 = vmatprep.subr.bf16.mxu0 0
      %1789 = vmatpush1.bf16.msra.mxu0 %v1719
      %1790 = vmatprep.subr.bf16.mxu0 0
      %1791 = vmatpush1.bf16.msra.mxu0 %v1718
      %1792 = vmatprep.subr.bf16.mxu0 0
      %1793 = vmatpush1.bf16.msra.mxu0 %v1717
      %1794 = vmatprep.subr.bf16.mxu0 0
      %1795 = vmatpush1.bf16.msra.mxu0 %v1716
      %1796 = vmatprep.subr.bf16.mxu0 0
      %1797 = vmatpush2.bf16.msra.mxu0 %v1731
      %1798 = vmatprep.subr.bf16.mxu0 0
      %1799 = vmatpush2.bf16.msra.mxu0 %v1730
      %1800 = vmatprep.subr.bf16.mxu0 0
      %1801 = vmatpush2.bf16.msra.mxu0 %v1729
      %1802 = vmatprep.subr.bf16.mxu0 0
      %1803 = vmatpush2.bf16.msra.mxu0 %v1728
      %1804 = vmatprep.subr.bf16.mxu0 0
      %1805 = vmatpush2.bf16.msra.mxu0 %v1727
      %1806 = vmatprep.subr.bf16.mxu0 0
      %1807 = vmatpush2.bf16.msra.mxu0 %v1726
      %1808 = vmatprep.subr.bf16.mxu0 0
      %1809 = vmatpush2.bf16.msra.mxu0 %v1725
      %1810 = vmatprep.subr.bf16.mxu0 0
      %1811 = vmatpush2.bf16.msra.mxu0 %v1724
      %1812 = vmatprep.mubr.bf16.mxu0 %v1581
      %1813 = vmatmul.mubr.bf16.gmra.mxu0 %v1580
      %v1814 = vpop.f32.mrf.mxu0
      %v1815 = vadd.f32 %v1567, %v1814
      %v1816 = vpop.f32.mrf.mxu0
      %v1817 = vpop.f32.mrf.mxu0
      %v1818 = vadd.f32 %v1567, %v1817
      %v1819 = vpop.f32.mrf.mxu0
      %1820 = vdwg.mxu0
      %1821 = vmatprep.subr.bf16.mxu0 0
      %1822 = vmatpush1.bf16.msra.mxu0 %v1739
      %1823 = vmatprep.subr.bf16.mxu0 0
      %1824 = vmatpush1.bf16.msra.mxu0 %v1738
      %1825 = vmatprep.subr.bf16.mxu0 0
      %1826 = vmatpush1.bf16.msra.mxu0 %v1737
      %1827 = vmatprep.subr.bf16.mxu0 0
      %1828 = vmatpush1.bf16.msra.mxu0 %v1736
      %1829 = vmatprep.subr.bf16.mxu0 0
      %1830 = vmatpush1.bf16.msra.mxu0 %v1735
      %1831 = vmatprep.subr.bf16.mxu0 0
      %1832 = vmatpush1.bf16.msra.mxu0 %v1734
      %1833 = vmatprep.subr.bf16.mxu0 0
      %1834 = vmatpush1.bf16.msra.mxu0 %v1733
      %1835 = vmatprep.subr.bf16.mxu0 0
      %1836 = vmatpush1.bf16.msra.mxu0 %v1732
      %1837 = vmatprep.subr.bf16.mxu0 0
      %1838 = vmatpush2.bf16.msra.mxu0 %v1747
      %1839 = vmatprep.subr.bf16.mxu0 0
      %1840 = vmatpush2.bf16.msra.mxu0 %v1746
      %1841 = vmatprep.subr.bf16.mxu0 0
      %1842 = vmatpush2.bf16.msra.mxu0 %v1745
      %1843 = vmatprep.subr.bf16.mxu0 0
      %1844 = vmatpush2.bf16.msra.mxu0 %v1744
      %1845 = vmatprep.subr.bf16.mxu0 0
      %1846 = vmatpush2.bf16.msra.mxu0 %v1743
      %1847 = vmatprep.subr.bf16.mxu0 0
      %1848 = vmatpush2.bf16.msra.mxu0 %v1742
      %1849 = vmatprep.subr.bf16.mxu0 0
      %1850 = vmatpush2.bf16.msra.mxu0 %v1741
      %1851 = vmatprep.subr.bf16.mxu0 0
      %1852 = vmatpush2.bf16.msra.mxu0 %v1740
      %1853 = vmatprep.mubr.bf16.mxu0 %v1583
      %1854 = vmatmul.mubr.bf16.gmra.mxu0 %v1582
      %v1855 = vpop.f32.mrf.mxu0
      %v1856 = vadd.f32 %v1815, %v1855
      %v1857 = vpop.f32.mrf.mxu0
      %v1858 = vpop.f32.mrf.mxu0
      %v1859 = vadd.f32 %v1818, %v1858
      %v1860 = vpop.f32.mrf.mxu0
      %1861 = vdwg.mxu0
      %v1862 = vmax.f32 %v1856, 0.0
      %v1863 = vmax.f32 %v1859, 0.0
      %v1864 = vpack.c.bf16 %v1863, %v1862
      %v1866 = vunpack.c.l.b16 %v1864
      %v1867 = vunpack.c.h.b16 %v1864
      %v1868 = vpack.c.b16 %v1866, %v1866
      %v1869 = vpack.c.b16 %v1867, %v1867
      %1872 = vst [vmem:[%s363] sm:$0xf] %v1868
      %1873 = vst [vmem:[%s363 + $0x4] sm:$0xf] %v1869
      %1874 = vst [vmem:[#allocation4] sm:$0x3] %v1864
      %v1876 = vunpack.c.l.s4 1983009808
      %v1877 = vunpack.c.0.s8 %v1876
      %v1878 = vlaneseq
      %v1879 = vshrl.u32 %v1878, 7
      %v1880 = vsub.s32 %v1877, %v1879
      %v1881 = vrot.slane %v1864, %v1880
      %v1882 = vcombine.high %v1881, %v1881
      %1884 = vst [vmem:[#allocation4 + $0x2] sm:$0x3] %v1882
      %v1885 = vcombine.high %v1864, %v1864
      %v1887 = vunpack.c.l.s4 1983009808
      %v1888 = vunpack.c.0.s8 %v1887
      %v1889 = vlaneseq
      %v1890 = vshrl.u32 %v1889, 7
      %v1891 = vsub.s32 %v1888, %v1890
      %v1892 = vrot.slane %v1885, %v1891
      %1894 = vst [vmem:[#allocation4 + $0x4] sm:$0x3] %v1892
      %v1895 = vcombine.high %v1892, %v1892
      %1897 = vst [vmem:[#allocation4 + $0x6] sm:$0x3] %v1895
      %v1898 = vld [vmem:[#allocation4] sm:$0xff]
      %v1899 = vld [vmem:[%s4] sm:$0xf]
      %v1900 = vld [vmem:[%s4 + $0x4] sm:$0xf]
      %v1901 = vld [vmem:[%s4 + $0x8] sm:$0xf]
      %v1902 = vld [vmem:[%s4 + $0xc] sm:$0xf]
      %v1903 = vld [vmem:[%s4 + $0x10] sm:$0xf]
      %v1904 = vld [vmem:[%s4 + $0x14] sm:$0xf]
      %v1905 = vld [vmem:[%s4 + $0x18] sm:$0xf]
      %v1906 = vld [vmem:[%s4 + $0x1c] sm:$0xf]
      %v1907 = vld [vmem:[%s4 + $0x20] sm:$0xf]
      %v1908 = vld [vmem:[%s4 + $0x24] sm:$0xf]
      %v1909 = vld [vmem:[%s4 + $0x28] sm:$0xf]
      %v1910 = vld [vmem:[%s4 + $0x2c] sm:$0xf]
      %v1911 = vld [vmem:[%s4 + $0x30] sm:$0xf]
      %v1912 = vld [vmem:[%s4 + $0x34] sm:$0xf]
      %v1913 = vld [vmem:[%s4 + $0x38] sm:$0xf]
      %v1914 = vld [vmem:[%s4 + $0x3c] sm:$0xf]
      %v1915 = vld [vmem:[%s4 + $0x40] sm:$0xf]
      %v1916 = vld [vmem:[%s4 + $0x44] sm:$0xf]
      %v1917 = vld [vmem:[%s4 + $0x48] sm:$0xf]
      %v1918 = vld [vmem:[%s4 + $0x4c] sm:$0xf]
      %v1919 = vld [vmem:[%s4 + $0x50] sm:$0xf]
      %v1920 = vld [vmem:[%s4 + $0x54] sm:$0xf]
      %v1921 = vld [vmem:[%s4 + $0x58] sm:$0xf]
      %v1922 = vld [vmem:[%s4 + $0x5c] sm:$0xf]
      %v1923 = vld [vmem:[%s4 + $0x60] sm:$0xf]
      %v1924 = vld [vmem:[%s4 + $0x64] sm:$0xf]
      %v1925 = vld [vmem:[%s4 + $0x68] sm:$0xf]
      %v1926 = vld [vmem:[%s4 + $0x6c] sm:$0xf]
      %v1927 = vld [vmem:[%s4 + $0x70] sm:$0xf]
      %v1928 = vld [vmem:[%s4 + $0x74] sm:$0xf]
      %v1929 = vld [vmem:[%s4 + $0x78] sm:$0xf]
      %v1930 = vld [vmem:[%s4 + $0x7c] sm:$0xf]
      %v1931 = vld [vmem:[%s4 + $0x80] sm:$0xf]
      %v1932 = vld [vmem:[%s4 + $0x84] sm:$0xf]
      %v1933 = vld [vmem:[%s4 + $0x88] sm:$0xf]
      %v1934 = vld [vmem:[%s4 + $0x8c] sm:$0xf]
      %v1935 = vld [vmem:[%s4 + $0x90] sm:$0xf]
      %v1936 = vld [vmem:[%s4 + $0x94] sm:$0xf]
      %v1937 = vld [vmem:[%s4 + $0x98] sm:$0xf]
      %v1938 = vld [vmem:[%s4 + $0x9c] sm:$0xf]
      %v1939 = vld [vmem:[%s4 + $0xa0] sm:$0xf]
      %v1940 = vld [vmem:[%s4 + $0xa4] sm:$0xf]
      %v1941 = vld [vmem:[%s4 + $0xa8] sm:$0xf]
      %v1942 = vld [vmem:[%s4 + $0xac] sm:$0xf]
      %v1943 = vld [vmem:[%s4 + $0xb0] sm:$0xf]
      %v1944 = vld [vmem:[%s4 + $0xb4] sm:$0xf]
      %v1945 = vld [vmem:[%s4 + $0xb8] sm:$0xf]
      %v1946 = vld [vmem:[%s4 + $0xbc] sm:$0xf]
      %v1947 = vld [vmem:[%s4 + $0xc0] sm:$0xf]
      %v1948 = vld [vmem:[%s4 + $0xc4] sm:$0xf]
      %v1949 = vld [vmem:[%s4 + $0xc8] sm:$0xf]
      %v1950 = vld [vmem:[%s4 + $0xcc] sm:$0xf]
      %v1951 = vld [vmem:[%s4 + $0xd0] sm:$0xf]
      %v1952 = vld [vmem:[%s4 + $0xd4] sm:$0xf]
      %v1953 = vld [vmem:[%s4 + $0xd8] sm:$0xf]
      %v1954 = vld [vmem:[%s4 + $0xdc] sm:$0xf]
      %v1955 = vld [vmem:[%s4 + $0xe0] sm:$0xf]
      %v1956 = vld [vmem:[%s4 + $0xe4] sm:$0xf]
      %v1957 = vld [vmem:[%s4 + $0xe8] sm:$0xf]
      %v1958 = vld [vmem:[%s4 + $0xec] sm:$0xf]
      %v1959 = vld [vmem:[%s4 + $0xf0] sm:$0xf]
      %v1960 = vld [vmem:[%s4 + $0xf4] sm:$0xf]
      %v1961 = vld [vmem:[%s4 + $0xf8] sm:$0xf]
      %v1962 = vld [vmem:[%s4 + $0xfc] sm:$0xf]
      %v1963 = vld [vmem:[%s5 + $0x3] sm:$0x1]
      %v1964 = vlaneseq
      %v1965 = vshrl.u32 %v1964, 7
      %v1966 = vsub.s32 0, %v1965
      %v1967 = vrot.slane %v1963, %v1966
      %v1969 = vcombine.high %v1898, %v1898
      %v1971 = vunpack.c.l.s4 1983009808
      %v1972 = vunpack.c.0.s8 %v1971
      %v1973 = vlaneseq
      %v1974 = vshrl.u32 %v1973, 7
      %v1975 = vsub.s32 %v1972, %v1974
      %v1976 = vrot.slane %v1898, %v1975
      %v1978 = vunpack.c.l.s4 1983009808
      %v1979 = vunpack.c.0.s8 %v1978
      %v1980 = vlaneseq
      %v1981 = vshrl.u32 %v1980, 7
      %v1982 = vsub.s32 %v1979, %v1981
      %v1983 = vrot.slane %v1969, %v1982
      %v1984 = vcombine.high %v1976, %v1976
      %v1985 = vcombine.high %v1983, %v1983
      %v2054 = vunpack.c.l.b16 %v1899
      %v2055 = vunpack.c.l.b16 %v1900
      %v2056 = vunpack.c.l.b16 %v1901
      %v2057 = vunpack.c.l.b16 %v1902
      %v2058 = vunpack.c.l.b16 %v1903
      %v2059 = vunpack.c.l.b16 %v1904
      %v2060 = vunpack.c.l.b16 %v1905
      %v2061 = vunpack.c.l.b16 %v1906
      %v2062 = vunpack.c.l.b16 %v1907
      %v2063 = vunpack.c.l.b16 %v1908
      %v2064 = vunpack.c.l.b16 %v1909
      %v2065 = vunpack.c.l.b16 %v1910
      %v2066 = vunpack.c.l.b16 %v1911
      %v2067 = vunpack.c.l.b16 %v1912
      %v2068 = vunpack.c.l.b16 %v1913
      %v2069 = vunpack.c.l.b16 %v1914
      %v2070 = vunpack.c.l.b16 %v1915
      %v2071 = vunpack.c.l.b16 %v1916
      %v2072 = vunpack.c.l.b16 %v1917
      %v2073 = vunpack.c.l.b16 %v1918
      %v2074 = vunpack.c.l.b16 %v1919
      %v2075 = vunpack.c.l.b16 %v1920
      %v2076 = vunpack.c.l.b16 %v1921
      %v2077 = vunpack.c.l.b16 %v1922
      %v2078 = vunpack.c.l.b16 %v1923
      %v2079 = vunpack.c.l.b16 %v1924
      %v2080 = vunpack.c.l.b16 %v1925
      %v2081 = vunpack.c.l.b16 %v1926
      %v2082 = vunpack.c.l.b16 %v1927
      %v2083 = vunpack.c.l.b16 %v1928
      %v2084 = vunpack.c.l.b16 %v1929
      %v2085 = vunpack.c.l.b16 %v1930
      %v2086 = vunpack.c.l.b16 %v1931
      %v2087 = vunpack.c.l.b16 %v1932
      %v2088 = vunpack.c.l.b16 %v1933
      %v2089 = vunpack.c.l.b16 %v1934
      %v2090 = vunpack.c.l.b16 %v1935
      %v2091 = vunpack.c.l.b16 %v1936
      %v2092 = vunpack.c.l.b16 %v1937
      %v2093 = vunpack.c.l.b16 %v1938
      %v2094 = vunpack.c.l.b16 %v1939
      %v2095 = vunpack.c.l.b16 %v1940
      %v2096 = vunpack.c.l.b16 %v1941
      %v2097 = vunpack.c.l.b16 %v1942
      %v2098 = vunpack.c.l.b16 %v1943
      %v2099 = vunpack.c.l.b16 %v1944
      %v2100 = vunpack.c.l.b16 %v1945
      %v2101 = vunpack.c.l.b16 %v1946
      %v2102 = vunpack.c.l.b16 %v1947
      %v2103 = vunpack.c.l.b16 %v1948
      %v2104 = vunpack.c.l.b16 %v1949
      %v2105 = vunpack.c.l.b16 %v1950
      %v2106 = vunpack.c.l.b16 %v1951
      %v2107 = vunpack.c.l.b16 %v1952
      %v2108 = vunpack.c.l.b16 %v1953
      %v2109 = vunpack.c.l.b16 %v1954
      %v2110 = vunpack.c.l.b16 %v1955
      %v2111 = vunpack.c.l.b16 %v1956
      %v2112 = vunpack.c.l.b16 %v1957
      %v2113 = vunpack.c.l.b16 %v1958
      %v2114 = vunpack.c.l.b16 %v1959
      %v2115 = vunpack.c.l.b16 %v1960
      %v2116 = vunpack.c.l.b16 %v1961
      %v2117 = vunpack.c.l.b16 %v1962
      %v2118 = vpack.c.b16 %v2055, %v2054
      %v2119 = vpack.c.b16 %v2057, %v2056
      %v2120 = vpack.c.b16 %v2059, %v2058
      %v2121 = vpack.c.b16 %v2061, %v2060
      %v2122 = vpack.c.b16 %v2063, %v2062
      %v2123 = vpack.c.b16 %v2065, %v2064
      %v2124 = vpack.c.b16 %v2067, %v2066
      %v2125 = vpack.c.b16 %v2069, %v2068
      %v2126 = vpack.c.b16 %v2071, %v2070
      %v2127 = vpack.c.b16 %v2073, %v2072
      %v2128 = vpack.c.b16 %v2075, %v2074
      %v2129 = vpack.c.b16 %v2077, %v2076
      %v2130 = vpack.c.b16 %v2079, %v2078
      %v2131 = vpack.c.b16 %v2081, %v2080
      %v2132 = vpack.c.b16 %v2083, %v2082
      %v2133 = vpack.c.b16 %v2085, %v2084
      %v2134 = vpack.c.b16 %v2087, %v2086
      %v2135 = vpack.c.b16 %v2089, %v2088
      %v2136 = vpack.c.b16 %v2091, %v2090
      %v2137 = vpack.c.b16 %v2093, %v2092
      %v2138 = vpack.c.b16 %v2095, %v2094
      %v2139 = vpack.c.b16 %v2097, %v2096
      %v2140 = vpack.c.b16 %v2099, %v2098
      %v2141 = vpack.c.b16 %v2101, %v2100
      %v2142 = vpack.c.b16 %v2103, %v2102
      %v2143 = vpack.c.b16 %v2105, %v2104
      %v2144 = vpack.c.b16 %v2107, %v2106
      %v2145 = vpack.c.b16 %v2109, %v2108
      %v2146 = vpack.c.b16 %v2111, %v2110
      %v2147 = vpack.c.b16 %v2113, %v2112
      %v2148 = vpack.c.b16 %v2115, %v2114
      %v2149 = vpack.c.b16 %v2117, %v2116
      %2182 = vmatprep.subr.bf16.mxu0 0
      %2183 = vmatpush1.bf16.msra.mxu0 %v2125
      %2184 = vmatprep.subr.bf16.mxu0 0
      %2185 = vmatpush1.bf16.msra.mxu0 %v2124
      %2186 = vmatprep.subr.bf16.mxu0 0
      %2187 = vmatpush1.bf16.msra.mxu0 %v2123
      %2188 = vmatprep.subr.bf16.mxu0 0
      %2189 = vmatpush1.bf16.msra.mxu0 %v2122
      %2190 = vmatprep.subr.bf16.mxu0 0
      %2191 = vmatpush1.bf16.msra.mxu0 %v2121
      %2192 = vmatprep.subr.bf16.mxu0 0
      %2193 = vmatpush1.bf16.msra.mxu0 %v2120
      %2194 = vmatprep.subr.bf16.mxu0 0
      %2195 = vmatpush1.bf16.msra.mxu0 %v2119
      %2196 = vmatprep.subr.bf16.mxu0 0
      %2197 = vmatpush1.bf16.msra.mxu0 %v2118
      %2198 = vmatprep.subr.bf16.mxu0 0
      %2199 = vmatpush2.bf16.msra.mxu0 %v2133
      %2200 = vmatprep.subr.bf16.mxu0 0
      %2201 = vmatpush2.bf16.msra.mxu0 %v2132
      %2202 = vmatprep.subr.bf16.mxu0 0
      %2203 = vmatpush2.bf16.msra.mxu0 %v2131
      %2204 = vmatprep.subr.bf16.mxu0 0
      %2205 = vmatpush2.bf16.msra.mxu0 %v2130
      %2206 = vmatprep.subr.bf16.mxu0 0
      %2207 = vmatpush2.bf16.msra.mxu0 %v2129
      %2208 = vmatprep.subr.bf16.mxu0 0
      %2209 = vmatpush2.bf16.msra.mxu0 %v2128
      %2210 = vmatprep.subr.bf16.mxu0 0
      %2211 = vmatpush2.bf16.msra.mxu0 %v2127
      %2212 = vmatprep.subr.bf16.mxu0 0
      %2213 = vmatpush2.bf16.msra.mxu0 %v2126
      %2214 = vmatprep.mubr.bf16.mxu0 %v1984
      %2215 = vmatmul.mubr.bf16.gmra.mxu0 %v1976
      %v2216 = vpop.f32.mrf.mxu0
      %v2217 = vadd.f32 %v1967, %v2216
      %v2218 = vpop.f32.mrf.mxu0
      %v2219 = vpop.f32.mrf.mxu0
      %v2220 = vpop.f32.mrf.mxu0
      %2221 = vdwg.mxu0
      %2222 = vmatprep.subr.bf16.mxu0 0
      %2223 = vmatpush1.bf16.msra.mxu0 %v2141
      %2224 = vmatprep.subr.bf16.mxu0 0
      %2225 = vmatpush1.bf16.msra.mxu0 %v2140
      %2226 = vmatprep.subr.bf16.mxu0 0
      %2227 = vmatpush1.bf16.msra.mxu0 %v2139
      %2228 = vmatprep.subr.bf16.mxu0 0
      %2229 = vmatpush1.bf16.msra.mxu0 %v2138
      %2230 = vmatprep.subr.bf16.mxu0 0
      %2231 = vmatpush1.bf16.msra.mxu0 %v2137
      %2232 = vmatprep.subr.bf16.mxu0 0
      %2233 = vmatpush1.bf16.msra.mxu0 %v2136
      %2234 = vmatprep.subr.bf16.mxu0 0
      %2235 = vmatpush1.bf16.msra.mxu0 %v2135
      %2236 = vmatprep.subr.bf16.mxu0 0
      %2237 = vmatpush1.bf16.msra.mxu0 %v2134
      %2238 = vmatprep.subr.bf16.mxu0 0
      %2239 = vmatpush2.bf16.msra.mxu0 %v2149
      %2240 = vmatprep.subr.bf16.mxu0 0
      %2241 = vmatpush2.bf16.msra.mxu0 %v2148
      %2242 = vmatprep.subr.bf16.mxu0 0
      %2243 = vmatpush2.bf16.msra.mxu0 %v2147
      %2244 = vmatprep.subr.bf16.mxu0 0
      %2245 = vmatpush2.bf16.msra.mxu0 %v2146
      %2246 = vmatprep.subr.bf16.mxu0 0
      %2247 = vmatpush2.bf16.msra.mxu0 %v2145
      %2248 = vmatprep.subr.bf16.mxu0 0
      %2249 = vmatpush2.bf16.msra.mxu0 %v2144
      %2250 = vmatprep.subr.bf16.mxu0 0
      %2251 = vmatpush2.bf16.msra.mxu0 %v2143
      %2252 = vmatprep.subr.bf16.mxu0 0
      %2253 = vmatpush2.bf16.msra.mxu0 %v2142
      %2254 = vmatprep.mubr.bf16.mxu0 %v1985
      %2255 = vmatmul.mubr.bf16.gmra.mxu0 %v1983
      %v2256 = vpop.f32.mrf.mxu0
      %v2257 = vadd.f32 %v2217, %v2256
      %v2258 = vpop.f32.mrf.mxu0
      %v2259 = vpop.f32.mrf.mxu0
      %v2260 = vpop.f32.mrf.mxu0
      %2261 = vdwg.mxu0
      %v2262 = vmax.f32 %v2257, 0.0
      %v2263 = vpack.c.bf16 %v2262, %v2262
      %2264 = vst [vmem:[%s367] sm:$0x3] %v2263
      %p2265 = scmp.lt.s32.totalorder %s21, 1
      %s2266 = scalar_select %p2265, %s21, 1
      %s2267 = smul.addr %s2266, 32
      %s2268 = smul.addr %s2267, 4
      %s2269 = scalar_lea.vmem %s6, %s2268
      %p2270 = scmp.lt.s32.totalorder %s21, 1
      %s2271 = scalar_select %p2270, %s21, 1
      %s2272 = smul.addr %s2271, 8
      %s2273 = smul.addr %s2272, 4
      %s2274 = scalar_lea.vmem %s7, %s2273
      %p2275 = scmp.lt.s32.totalorder %s21, 1
      %s2276 = scalar_select %p2275, %s21, 1
      %s2277 = smul.addr %s2276, 2
      %s2278 = smul.addr %s2277, 4
      %s2279 = scalar_lea.vmem %s8, %s2278
      %p2280 = scmp.lt.s32.totalorder %s21, 1
      %s2281 = scalar_select %p2280, %s21, 1
      %s2282 = smul.addr %s2281, 2
      %s2283 = scalar_lea.vmem %s9, %s2282
      // Predicated region
      $region45: #{forward.1} parent=43 // pred_check
        %p2284 = pneg %p170
      $region46: #{forward.1} parent=43 // pred_check_branch
        %2286 = sbr.rel (%p2284) target = $region48
      $region47: #{forward.1} parent=43 // pred_region
        _
      $region48: #{forward.1} parent=43 // pred_fallthru
        _
      // Predicated region
      $region49: #{forward.1} parent=43 // pred_check
        %p2287 = pneg %p196
      $region50: #{forward.1} parent=43 // pred_check_branch
        %2289 = sbr.rel (%p2287) target = $region52
      $region51: #{forward.1} parent=43 // pred_region
        _
      $region52: #{forward.1} parent=43 // pred_fallthru
        _
      // Predicated region
      $region53: #{forward.1} parent=43 // pred_check
        %p2290 = pneg %p222
      $region54: #{forward.1} parent=43 // pred_check_branch
        %2292 = sbr.rel (%p2290) target = $region56
      $region55: #{forward.1} parent=43 // pred_region
        _
      $region56: #{forward.1} parent=43 // pred_fallthru
        _
      // Predicated region
      $region57: #{forward.1} parent=43 // pred_check
        %p2293 = pneg %p248
      $region58: #{forward.1} parent=43 // pred_check_branch
        %2295 = sbr.rel (%p2293) target = $region60
      $region59: #{forward.1} parent=43 // pred_region
        _
      $region60: #{forward.1} parent=43 // pred_fallthru
        _
    $region44: #{forward.1} parent=5 // pred_fallthru
      _
    %p2296 = scmp.le.s32.totalorder 2, %s16
    // Predicated region
    $region61: #{forward.1} parent=5 // pred_check
      %p2297 = pneg %p2296
    $region62: #{forward.1} parent=5 // pred_check_branch
      %2299 = sbr.rel (%p2297) target = $region64
    $region63: #{forward.1} parent=5 // pred_region
      %s2300 = ssub.s32 %s16, 2
      // Predicated region
      $region65: #{forward.1} parent=63 // pred_check
        %p2301 = pneg %p176
      $region66: #{forward.1} parent=63 // pred_check_branch
        %2303 = sbr.rel (%p2301) target = $region68
      $region67: #{forward.1} parent=63 // pred_region
        %p2304 = scmp.lt.s32.totalorder %s22, 1
        %s2305 = scalar_select %p2304, %s22, 1
        %s2306 = smul.addr %s2305, 32
        %s2307 = smul.addr %s2306, 4
        %s2308 = scalar_lea.vmem %s6, %s2307
      $region68: #{forward.1} parent=63 // pred_fallthru
        _
      // Predicated region
      $region69: #{forward.1} parent=63 // pred_check
        %p2309 = pneg %p202
      $region70: #{forward.1} parent=63 // pred_check_branch
        %2311 = sbr.rel (%p2309) target = $region72
      $region71: #{forward.1} parent=63 // pred_region
        %p2312 = scmp.lt.s32.totalorder %s22, 1
        %s2313 = scalar_select %p2312, %s22, 1
        %s2314 = smul.addr %s2313, 8
        %s2315 = smul.addr %s2314, 4
        %s2316 = scalar_lea.vmem %s7, %s2315
      $region72: #{forward.1} parent=63 // pred_fallthru
        _
      // Predicated region
      $region73: #{forward.1} parent=63 // pred_check
        %p2317 = pneg %p228
      $region74: #{forward.1} parent=63 // pred_check_branch
        %2319 = sbr.rel (%p2317) target = $region76
      $region75: #{forward.1} parent=63 // pred_region
        %p2320 = scmp.lt.s32.totalorder %s22, 1
        %s2321 = scalar_select %p2320, %s22, 1
        %s2322 = smul.addr %s2321, 2
        %s2323 = smul.addr %s2322, 4
        %s2324 = scalar_lea.vmem %s8, %s2323
      $region76: #{forward.1} parent=63 // pred_fallthru
        _
      // Predicated region
      $region77: #{forward.1} parent=63 // pred_check
        %p2325 = pneg %p254
      $region78: #{forward.1} parent=63 // pred_check_branch
        %2327 = sbr.rel (%p2325) target = $region80
      $region79: #{forward.1} parent=63 // pred_region
        %p2328 = scmp.lt.s32.totalorder %s22, 1
        %s2329 = scalar_select %p2328, %s22, 1
        %s2330 = smul.addr %s2329, 2
        %s2331 = scalar_lea.vmem %s9, %s2330
      $region80: #{forward.1} parent=63 // pred_fallthru
        _
    $region64: #{forward.1} parent=5 // pred_fallthru
      _
  $region6: #{forward.1} parent=0 // loop_footer
    %s20 = sadd.s32 1, %s16
  $region7: #{forward.1} parent=0 // loop_footer_branch
    %15 = sbr.rel target = $region3
  $region8: #{forward.1} parent=0 // loop_exit
    _

</llo_original>
